<compile_context>
chip_gen: v6e
topology: v6e:2x2x1
jax: 0.10.0
libtpu: 0.0.40
codegen_flags: <defaults>
</compile_context>

<pallas_src>
import jax
import jax.numpy as jnp
from jax import lax
from jax.experimental import pallas as pl
from jax.experimental.pallas import tpu as pltpu

NEG_SLOPE = 0.01
BLOCK_M = 256  # tile along the pixel (lane) dimension


# ----------------------------------------------------------------------------
# Pallas kernels: out = leaky_relu(W @ A) [+ residual]
#   W: (Cout, K) bf16, A: (K, M) bf16, out / residual: (Cout, M) f32.
#   The pixel axis M is the last (lane) dimension -> lane-dense stores.
# ----------------------------------------------------------------------------
def _matmul_lrelu_kernel(w_ref, a_ref, o_ref):
    acc = jnp.dot(w_ref[...], a_ref[...], preferred_element_type=jnp.float32)
    o_ref[...] = jnp.where(acc >= 0.0, acc, NEG_SLOPE * acc)


def _matmul_lrelu_res_kernel(w_ref, a_ref, r_ref, o_ref):
    acc = jnp.dot(w_ref[...], a_ref[...], preferred_element_type=jnp.float32)
    o_ref[...] = jnp.where(acc >= 0.0, acc, NEG_SLOPE * acc) + r_ref[...]


def matmul_lrelu_t(wmat, a_t, residual=None, *, block_m=BLOCK_M):
    """leaky_relu(wmat @ a_t) (+ residual).  wmat (Cout,K), a_t (K,M) -> (Cout,M) f32."""
    cout, k = wmat.shape
    k2, m = a_t.shape
    assert k == k2
    w_b = wmat.astype(jnp.bfloat16)
    a_b = a_t.astype(jnp.bfloat16)

    tm = min(block_m, m)          # small deep layers: one full-size block, no padding
    grid = (pl.cdiv(m, tm),)

    out_bytes = cout * m * 4
    cost = pl.CostEstimate(
        flops=2 * cout * k * m,
        transcendentals=0,
        bytes_accessed=(cout * k + k * m) * 2 + out_bytes
        + (out_bytes if residual is not None else 0),
    )

    in_specs = [
        pl.BlockSpec((cout, k), lambda i: (0, 0)),  # weights: VMEM-resident
        pl.BlockSpec((k, tm), lambda i: (0, i)),    # patch columns
    ]
    args = [w_b, a_b]
    if residual is None:
        kernel = _matmul_lrelu_kernel
    else:
        kernel = _matmul_lrelu_res_kernel
        in_specs.append(pl.BlockSpec((cout, tm), lambda i: (0, i)))
        args.append(residual)

    return pl.pallas_call(
        kernel,
        out_shape=jax.ShapeDtypeStruct((cout, m), jnp.float32),
        grid=grid,
        in_specs=in_specs,
        out_specs=pl.BlockSpec((cout, tm), lambda i: (0, i)),
        compiler_params=pltpu.CompilerParams(dimension_semantics=("parallel",)),
        cost_estimate=cost,
    )(*args)


# ----------------------------------------------------------------------------
# im2col glue in CNHW layout (free reshapes) + Pallas matmul
# ----------------------------------------------------------------------------
def _im2col_t(xs, kh, kw, stride, padding, oh, ow):
    """xs: list of (Ci, N, H, W) f32 chunks (an implicit channel concat).
    Returns the transposed patch matrix (kh*kw*sum(Ci), N*oh*ow) in bf16 with
    row ordering (tap-major, channel-minor), matching the weight reshape."""
    # TODO(synk): at larger shapes this patch matrix should be fused into the
    # Pallas kernel (tap grid axis + accumulator scratch) to avoid the kh*kw
    # HBM expansion; at 16x16x4 the expansion is tiny and one GEMM/call wins.
    n = xs[0].shape[1]
    ctot = sum(x.shape[0] for x in xs)
    xps = [
        jnp.pad(x.astype(jnp.bfloat16),
                ((0, 0), (0, 0), (padding, padding), (padding, padding)))
        for x in xs
    ]
    taps = []
    for i in range(kh):
        for j in range(kw):
            parts = [
                xp[:, :, i:i + stride * oh:stride, j:j + stride * ow:stride]
                for xp in xps
            ]
            taps.append(parts[0] if len(parts) == 1 else jnp.concatenate(parts, axis=0))
    a_t = jnp.stack(taps, axis=0)                   # (kh*kw, Ctot, N, oh, ow)
    return a_t.reshape(kh * kw * ctot, n * oh * ow)


def conv2d_lrelu(xs, w, stride, padding, residual=None):
    """Conv2d(bias=False)+LeakyReLU in CNHW layout.
    xs: list of (Ci, N, H, W) chunks (channel-concatenated input).
    w: PyTorch layout (Cout, Cin, kh, kw).  residual: optional (Cout, N, OH, OW)."""
    cout, cin, kh, kw = w.shape
    assert cin == sum(x.shape[0] for x in xs)
    _, n, h, wid = xs[0].shape
    oh = (h + 2 * padding - kh) // stride + 1
    ow = (wid + 2 * padding - kw) // stride + 1
    a_t = _im2col_t(xs, kh, kw, stride, padding, oh, ow)
    wmat = w.transpose(0, 2, 3, 1).reshape(cout, kh * kw * cin)  # (tap, chan) ordering
    res = None if residual is None else residual.reshape(cout, n * oh * ow)
    out = matmul_lrelu_t(wmat, a_t, res)            # (Cout, N*oh*ow)
    return out.reshape(cout, n, oh, ow)


def conv_transpose2d_lrelu(xs, wt, stride, padding):
    """ConvTranspose2d(bias=False)+LeakyReLU in CNHW layout.
    wt: PyTorch layout (Cin, Cout, kh, kw).  Lowered to a stride-1 conv of the
    zero-dilated input with the spatially-flipped, io-swapped kernel."""
    # TODO(synk): the stride^2 sub-pixel decomposition would avoid the 75%-zero
    # dilated input; at these tiny shapes a single fused GEMM per layer wins on
    # launch overhead, so the dilated form is kept.
    kh = wt.shape[2]

    def dilate(x):
        c, n, h, w = x.shape
        hd, wd = (h - 1) * stride + 1, (w - 1) * stride + 1
        return jnp.zeros((c, n, hd, wd), x.dtype).at[:, :, ::stride, ::stride].set(x)

    xd = [dilate(x) for x in xs]
    w_eq = jnp.flip(wt, axis=(2, 3)).transpose(1, 0, 2, 3)  # (Cout, Cin, kh, kw)
    return conv2d_lrelu(xd, w_eq, stride=1, padding=kh - 1 - padding)


# ----------------------------------------------------------------------------
# ResBlock (inner model = UnetBlock) parameters + forward
# ----------------------------------------------------------------------------
def init_params(key, in_channels=4, layers=3):
    channels = [in_channels * (2 ** i) for i in range(layers + 1)]
    params = {"down": [], "up": [], "dec": None}

    def _init(k, shape):
        fan_in = 1
        for d in shape[1:]:
            fan_in *= d
        return jax.random.normal(k, shape, jnp.float32) / jnp.sqrt(float(fan_in))

    keys = jax.random.split(key, 2 * layers + 1)
    up_weights = []
    for i, (ch1, ch2) in enumerate(zip(channels[:-1], channels[1:])):
        # down: Conv2d(ch1, ch2, k=3, s=2, p=1)
        params["down"].append(_init(keys[2 * i], (ch2, ch1, 3, 3)))
        # up: ConvTranspose2d(in, out, k=4, s=2, p=1); PyTorch weight (in, out, 4, 4)
        if ch2 == channels[-1]:
            up_weights.append(_init(keys[2 * i + 1], (ch2, ch1, 4, 4)))
        else:
            up_weights.append(_init(keys[2 * i + 1], (ch2 * 2, ch1, 4, 4)))
    up_weights.reverse()
    params["up"] = up_weights
    # decorder: Conv2d(channels[0]*2, channels[0], k=1, s=1, p=0)
    params["dec"] = _init(keys[-1], (channels[0], channels[0] * 2, 1, 1))
    return params


@jax.jit
def res_block_forward(x, params):
    """ResBlock.forward: x + UnetBlock(x).  x: (N, C, H, W) f32."""
    xc = jnp.transpose(x, (1, 0, 2, 3))       # NCHW -> CNHW, once
    cur = [xc]
    value = [xc]
    for w in params["down"]:
        y = conv2d_lrelu(cur, w, stride=2, padding=1)
        cur = [y]
        value.append(y)
    value = value[:-1]
    value.reverse()
    for wt, v in zip(params["up"], value):
        y = conv_transpose2d_lrelu(cur, wt, stride=2, padding=1)
        cur = [y, v]                           # skip concat folded into next im2col
    # decorder conv with the ResBlock residual add fused into the kernel epilogue
    out = conv2d_lrelu(cur, params["dec"], stride=1, padding=0, residual=xc)
    return jnp.transpose(out, (1, 0, 2, 3))    # CNHW -> NCHW, once


# ----------------------------------------------------------------------------
# Pure-JAX (XLA) reference for correctness cross-checks
# ----------------------------------------------------------------------------
_DN = lax.conv_dimension_numbers((1, 1, 1, 1), (1, 1, 1, 1), ("NCHW", "OIHW", "NCHW"))


def _lrelu(y):
    return jnp.where(y >= 0, y, NEG_SLOPE * y)


def _ref_conv(x, w, stride, padding, dtype):
    y = lax.conv_general_dilated(
        x.astype(dtype), w.astype(dtype), (stride, stride),
        [(padding, padding)] * 2, dimension_numbers=_DN,
        preferred_element_type=jnp.float32, precision=lax.Precision.HIGHEST)
    return _lrelu(y)


def _ref_convt(x, wt, stride, padding, dtype):
    k = wt.shape[2]
    w_eq = jnp.flip(wt, axis=(2, 3)).transpose(1, 0, 2, 3)
    y = lax.conv_general_dilated(
        x.astype(dtype), w_eq.astype(dtype), (1, 1),
        [(k - 1 - padding, k - 1 - padding)] * 2, lhs_dilation=(stride, stride),
        dimension_numbers=_DN, preferred_element_type=jnp.float32,
        precision=lax.Precision.HIGHEST)
    return _lrelu(y)


def res_block_reference(x, params, dtype):
    x0 = x
    value = [x]
    for w in params["down"]:
        x = _ref_conv(x, w, 2, 1, dtype)
        value.append(x)
    value = value[:-1]
    value.reverse()
    for wt, v in zip(params["up"], value):
        x = _ref_convt(x, wt, 2, 1, dtype)
        x = jnp.concatenate([x, v], axis=1)
    return x0 + _ref_conv(x, params["dec"], 1, 0, dtype)


# ----------------------------------------------------------------------------
if __name__ == "__main__":
    key = jax.random.PRNGKey(0)
    kx, kp = jax.random.split(key)

    in_channels, layers = 4, 3
    x = jax.random.normal(kx, (2, in_channels, 16, 16), jnp.float32)
    params = init_params(kp, in_channels=in_channels, layers=layers)

    out = jax.block_until_ready(res_block_forward(x, params))
    assert out.shape == (2, in_channels, 16, 16), out.shape

    # Tight logic check vs. a reference using the same bf16-in / f32-acc matmuls.
    ref_matched = jax.block_until_ready(res_block_reference(x, params, jnp.bfloat16))
    err_matched = float(jnp.max(jnp.abs(out - ref_matched)))
    assert err_matched < 5e-3, f"mismatch vs bf16-matched reference: {err_matched}"

    # Sanity bound vs. the full-fp32 reference (PyTorch-equivalent semantics).
    ref_f32 = jax.block_until_ready(res_block_reference(x, params, jnp.float32))
    err_f32 = float(jnp.max(jnp.abs(out - ref_f32)))
    assert err_f32 < 1e-1, f"mismatch vs fp32 reference: {err_f32}"

    print("KERNEL_OK")
</pallas_src>

<mosaic_0001>
module attributes {stable_mosaic.version = 11 : i64} {
  func.func @_matmul_lrelu_kernel(%arg0: i32, %arg1: memref<8x36xbf16, #tpu.memory_space<vmem>>, %arg2: memref<36x128xbf16, #tpu.memory_space<vmem>>, %arg3: memref<8x128xf32, #tpu.memory_space<vmem>>) attributes {dimension_semantics = [#tpu.dimension_semantics<parallel>], iteration_bounds = array<i64: 1>, scalar_prefetch = 0 : i64, scratch_operands = 0 : i64, tpu.core_type = #tpu.core_type<tc>, window_params = [{pipeline_mode = #tpu.pipeline_mode<synchronous>, transform_indices = @transform_0, window_bounds = array<i64: 8, 36>}, {transform_indices = @transform_1, window_bounds = array<i64: 36, 128>}, {transform_indices = @transform_2, window_bounds = array<i64: 8, 128>}]} {
    %c0 = arith.constant 0 : index
    %c0_0 = arith.constant 0 : index
    %0 = vector.load %arg1[%c0, %c0_0] : memref<8x36xbf16, #tpu.memory_space<vmem>>, vector<8x36xbf16>
    %c0_1 = arith.constant 0 : index
    %c0_2 = arith.constant 0 : index
    %1 = vector.load %arg2[%c0_1, %c0_2] : memref<36x128xbf16, #tpu.memory_space<vmem>>, vector<36x128xbf16>
    %cst = arith.constant dense<0.000000e+00> : vector<8x128xf32>
    %2 = tpu.matmul %0, %1, %cst {dimension_numbers = #tpu.dot_dimension_numbers<[1], [0], [0], [1], [0, 0, 1, 1], [], []>} : vector<8x36xbf16>, vector<36x128xbf16>, vector<8x128xf32> -> vector<8x128xf32>
    %cst_3 = arith.constant 0.000000e+00 : f32
    %3 = vector.broadcast %cst_3 : f32 to vector<8x128xf32>
    %4 = arith.cmpf oge, %2, %3 : vector<8x128xf32>
    %cst_4 = arith.constant 0.00999999977 : f32
    %5 = vector.broadcast %cst_4 : f32 to vector<8x128xf32>
    %6 = arith.mulf %5, %2 : vector<8x128xf32>
    %7 = arith.select %4, %2, %6 : vector<8x128xi1>, vector<8x128xf32>
    %c0_5 = arith.constant 0 : index
    %c0_6 = arith.constant 0 : index
    %8 = vector.load %arg3[%c0_5, %c0_6] : memref<8x128xf32, #tpu.memory_space<vmem>>, vector<8x128xf32>
    tpu.vector_store %arg3[%c0_5, %c0_6], %7 {strides = array<i32>} : memref<8x128xf32, #tpu.memory_space<vmem>>, vector<8x128xf32>,
    return
  }
  func.func @transform_0(%arg0: i32) -> (i32, i32) {
    %c0_i32 = arith.constant 0 : i32
    %c0_i32_0 = arith.constant 0 : i32
    %c0_i32_1 = arith.constant 0 : i32
    return %c0_i32, %c0_i32_0 : i32, i32
  }
  func.func @transform_1(%arg0: i32) -> (i32, i32) {
    %c0_i32 = arith.constant 0 : i32
    %c0_i32_0 = arith.constant 0 : i32
    return %c0_i32, %arg0 : i32, i32
  }
  func.func @transform_2(%arg0: i32) -> (i32, i32) {
    %c0_i32 = arith.constant 0 : i32
    %c0_i32_0 = arith.constant 0 : i32
    return %c0_i32, %arg0 : i32, i32
  }
}

module attributes {stable_mosaic.version = 11 : i64} {
  func.func @_matmul_lrelu_kernel(%arg0: i32, %arg1: memref<16x72xbf16, #tpu.memory_space<vmem>>, %arg2: memref<72x32xbf16, #tpu.memory_space<vmem>>, %arg3: memref<16x32xf32, #tpu.memory_space<vmem>>) attributes {dimension_semantics = [#tpu.dimension_semantics<parallel>], iteration_bounds = array<i64: 1>, scalar_prefetch = 0 : i64, scratch_operands = 0 : i64, tpu.core_type = #tpu.core_type<tc>, window_params = [{pipeline_mode = #tpu.pipeline_mode<synchronous>, transform_indices = @transform_0, window_bounds = array<i64: 16, 72>}, {transform_indices = @transform_1, window_bounds = array<i64: 72, 32>}, {transform_indices = @transform_2, window_bounds = array<i64: 16, 32>}]} {
    %c0 = arith.constant 0 : index
    %c0_0 = arith.constant 0 : index
    %0 = vector.load %arg1[%c0, %c0_0] : memref<16x72xbf16, #tpu.memory_space<vmem>>, vector<16x72xbf16>
    %c0_1 = arith.constant 0 : index
    %c0_2 = arith.constant 0 : index
    %1 = vector.load %arg2[%c0_1, %c0_2] : memref<72x32xbf16, #tpu.memory_space<vmem>>, vector<72x32xbf16>
    %cst = arith.constant dense<0.000000e+00> : vector<16x32xf32>
    %2 = tpu.matmul %0, %1, %cst {dimension_numbers = #tpu.dot_dimension_numbers<[1], [0], [0], [1], [0, 0, 1, 1], [], []>} : vector<16x72xbf16>, vector<72x32xbf16>, vector<16x32xf32> -> vector<16x32xf32>
    %cst_3 = arith.constant 0.000000e+00 : f32
    %3 = vector.broadcast %cst_3 : f32 to vector<16x32xf32>
    %4 = arith.cmpf oge, %2, %3 : vector<16x32xf32>
    %cst_4 = arith.constant 0.00999999977 : f32
    %5 = vector.broadcast %cst_4 : f32 to vector<16x32xf32>
    %6 = arith.mulf %5, %2 : vector<16x32xf32>
    %7 = arith.select %4, %2, %6 : vector<16x32xi1>, vector<16x32xf32>
    %c0_5 = arith.constant 0 : index
    %c0_6 = arith.constant 0 : index
    %8 = vector.load %arg3[%c0_5, %c0_6] : memref<16x32xf32, #tpu.memory_space<vmem>>, vector<16x32xf32>
    tpu.vector_store %arg3[%c0_5, %c0_6], %7 {strides = array<i32>} : memref<16x32xf32, #tpu.memory_space<vmem>>, vector<16x32xf32>,
    return
  }
  func.func @transform_0(%arg0: i32) -> (i32, i32) {
    %c0_i32 = arith.constant 0 : i32
    %c0_i32_0 = arith.constant 0 : i32
    %c0_i32_1 = arith.constant 0 : i32
    return %c0_i32, %c0_i32_0 : i32, i32
  }
  func.func @transform_1(%arg0: i32) -> (i32, i32) {
    %c0_i32 = arith.constant 0 : i32
    %c0_i32_0 = arith.constant 0 : i32
    return %c0_i32, %arg0 : i32, i32
  }
  func.func @transform_2(%arg0: i32) -> (i32, i32) {
    %c0_i32 = arith.constant 0 : i32
    %c0_i32_0 = arith.constant 0 : i32
    return %c0_i32, %arg0 : i32, i32
  }
}

module attributes {stable_mosaic.version = 11 : i64} {
  func.func @_matmul_lrelu_kernel(%arg0: i32, %arg1: memref<32x144xbf16, #tpu.memory_space<vmem>>, %arg2: memref<144x8xbf16, #tpu.memory_space<vmem>>, %arg3: memref<32x8xf32, #tpu.memory_space<vmem>>) attributes {dimension_semantics = [#tpu.dimension_semantics<parallel>], iteration_bounds = array<i64: 1>, scalar_prefetch = 0 : i64, scratch_operands = 0 : i64, tpu.core_type = #tpu.core_type<tc>, window_params = [{pipeline_mode = #tpu.pipeline_mode<synchronous>, transform_indices = @transform_0, window_bounds = array<i64: 32, 144>}, {transform_indices = @transform_1, window_bounds = array<i64: 144, 8>}, {transform_indices = @transform_2, window_bounds = array<i64: 32, 8>}]} {
    %c0 = arith.constant 0 : index
    %c0_0 = arith.constant 0 : index
    %0 = vector.load %arg1[%c0, %c0_0] : memref<32x144xbf16, #tpu.memory_space<vmem>>, vector<32x144xbf16>
    %c0_1 = arith.constant 0 : index
    %c0_2 = arith.constant 0 : index
    %1 = vector.load %arg2[%c0_1, %c0_2] : memref<144x8xbf16, #tpu.memory_space<vmem>>, vector<144x8xbf16>
    %cst = arith.constant dense<0.000000e+00> : vector<32x8xf32>
    %2 = tpu.matmul %0, %1, %cst {dimension_numbers = #tpu.dot_dimension_numbers<[1], [0], [0], [1], [0, 0, 1, 1], [], []>} : vector<32x144xbf16>, vector<144x8xbf16>, vector<32x8xf32> -> vector<32x8xf32>
    %cst_3 = arith.constant 0.000000e+00 : f32
    %3 = vector.broadcast %cst_3 : f32 to vector<32x8xf32>
    %4 = arith.cmpf oge, %2, %3 : vector<32x8xf32>
    %cst_4 = arith.constant 0.00999999977 : f32
    %5 = vector.broadcast %cst_4 : f32 to vector<32x8xf32>
    %6 = arith.mulf %5, %2 : vector<32x8xf32>
    %7 = arith.select %4, %2, %6 : vector<32x8xi1>, vector<32x8xf32>
    %c0_5 = arith.constant 0 : index
    %c0_6 = arith.constant 0 : index
    %8 = vector.load %arg3[%c0_5, %c0_6] : memref<32x8xf32, #tpu.memory_space<vmem>>, vector<32x8xf32>
    tpu.vector_store %arg3[%c0_5, %c0_6], %7 {strides = array<i32>} : memref<32x8xf32, #tpu.memory_space<vmem>>, vector<32x8xf32>,
    return
  }
  func.func @transform_0(%arg0: i32) -> (i32, i32) {
    %c0_i32 = arith.constant 0 : i32
    %c0_i32_0 = arith.constant 0 : i32
    %c0_i32_1 = arith.constant 0 : i32
    return %c0_i32, %c0_i32_0 : i32, i32
  }
  func.func @transform_1(%arg0: i32) -> (i32, i32) {
    %c0_i32 = arith.constant 0 : i32
    %c0_i32_0 = arith.constant 0 : i32
    return %c0_i32, %arg0 : i32, i32
  }
  func.func @transform_2(%arg0: i32) -> (i32, i32) {
    %c0_i32 = arith.constant 0 : i32
    %c0_i32_0 = arith.constant 0 : i32
    return %c0_i32, %arg0 : i32, i32
  }
}

module attributes {stable_mosaic.version = 11 : i64} {
  func.func @_matmul_lrelu_kernel(%arg0: i32, %arg1: memref<16x512xbf16, #tpu.memory_space<vmem>>, %arg2: memref<512x32xbf16, #tpu.memory_space<vmem>>, %arg3: memref<16x32xf32, #tpu.memory_space<vmem>>) attributes {dimension_semantics = [#tpu.dimension_semantics<parallel>], iteration_bounds = array<i64: 1>, scalar_prefetch = 0 : i64, scratch_operands = 0 : i64, tpu.core_type = #tpu.core_type<tc>, window_params = [{pipeline_mode = #tpu.pipeline_mode<synchronous>, transform_indices = @transform_0, window_bounds = array<i64: 16, 512>}, {transform_indices = @transform_1, window_bounds = array<i64: 512, 32>}, {transform_indices = @transform_2, window_bounds = array<i64: 16, 32>}]} {
    %c0 = arith.constant 0 : index
    %c0_0 = arith.constant 0 : index
    %0 = vector.load %arg1[%c0, %c0_0] : memref<16x512xbf16, #tpu.memory_space<vmem>>, vector<16x512xbf16>
    %c0_1 = arith.constant 0 : index
    %c0_2 = arith.constant 0 : index
    %1 = vector.load %arg2[%c0_1, %c0_2] : memref<512x32xbf16, #tpu.memory_space<vmem>>, vector<512x32xbf16>
    %cst = arith.constant dense<0.000000e+00> : vector<16x32xf32>
    %2 = tpu.matmul %0, %1, %cst {dimension_numbers = #tpu.dot_dimension_numbers<[1], [0], [0], [1], [0, 0, 1, 1], [], []>} : vector<16x512xbf16>, vector<512x32xbf16>, vector<16x32xf32> -> vector<16x32xf32>
    %cst_3 = arith.constant 0.000000e+00 : f32
    %3 = vector.broadcast %cst_3 : f32 to vector<16x32xf32>
    %4 = arith.cmpf oge, %2, %3 : vector<16x32xf32>
    %cst_4 = arith.constant 0.00999999977 : f32
    %5 = vector.broadcast %cst_4 : f32 to vector<16x32xf32>
    %6 = arith.mulf %5, %2 : vector<16x32xf32>
    %7 = arith.select %4, %2, %6 : vector<16x32xi1>, vector<16x32xf32>
    %c0_5 = arith.constant 0 : index
    %c0_6 = arith.constant 0 : index
    %8 = vector.load %arg3[%c0_5, %c0_6] : memref<16x32xf32, #tpu.memory_space<vmem>>, vector<16x32xf32>
    tpu.vector_store %arg3[%c0_5, %c0_6], %7 {strides = array<i32>} : memref<16x32xf32, #tpu.memory_space<vmem>>, vector<16x32xf32>,
    return
  }
  func.func @transform_0(%arg0: i32) -> (i32, i32) {
    %c0_i32 = arith.constant 0 : i32
    %c0_i32_0 = arith.constant 0 : i32
    %c0_i32_1 = arith.constant 0 : i32
    return %c0_i32, %c0_i32_0 : i32, i32
  }
  func.func @transform_1(%arg0: i32) -> (i32, i32) {
    %c0_i32 = arith.constant 0 : i32
    %c0_i32_0 = arith.constant 0 : i32
    return %c0_i32, %arg0 : i32, i32
  }
  func.func @transform_2(%arg0: i32) -> (i32, i32) {
    %c0_i32 = arith.constant 0 : i32
    %c0_i32_0 = arith.constant 0 : i32
    return %c0_i32, %arg0 : i32, i32
  }
}

module attributes {stable_mosaic.version = 11 : i64} {
  func.func @_matmul_lrelu_kernel(%arg0: i32, %arg1: memref<8x512xbf16, #tpu.memory_space<vmem>>, %arg2: memref<512x128xbf16, #tpu.memory_space<vmem>>, %arg3: memref<8x128xf32, #tpu.memory_space<vmem>>) attributes {dimension_semantics = [#tpu.dimension_semantics<parallel>], iteration_bounds = array<i64: 1>, scalar_prefetch = 0 : i64, scratch_operands = 0 : i64, tpu.core_type = #tpu.core_type<tc>, window_params = [{pipeline_mode = #tpu.pipeline_mode<synchronous>, transform_indices = @transform_0, window_bounds = array<i64: 8, 512>}, {transform_indices = @transform_1, window_bounds = array<i64: 512, 128>}, {transform_indices = @transform_2, window_bounds = array<i64: 8, 128>}]} {
    %c0 = arith.constant 0 : index
    %c0_0 = arith.constant 0 : index
    %0 = vector.load %arg1[%c0, %c0_0] : memref<8x512xbf16, #tpu.memory_space<vmem>>, vector<8x512xbf16>
    %c0_1 = arith.constant 0 : index
    %c0_2 = arith.constant 0 : index
    %1 = vector.load %arg2[%c0_1, %c0_2] : memref<512x128xbf16, #tpu.memory_space<vmem>>, vector<512x128xbf16>
    %cst = arith.constant dense<0.000000e+00> : vector<8x128xf32>
    %2 = tpu.matmul %0, %1, %cst {dimension_numbers = #tpu.dot_dimension_numbers<[1], [0], [0], [1], [0, 0, 1, 1], [], []>} : vector<8x512xbf16>, vector<512x128xbf16>, vector<8x128xf32> -> vector<8x128xf32>
    %cst_3 = arith.constant 0.000000e+00 : f32
    %3 = vector.broadcast %cst_3 : f32 to vector<8x128xf32>
    %4 = arith.cmpf oge, %2, %3 : vector<8x128xf32>
    %cst_4 = arith.constant 0.00999999977 : f32
    %5 = vector.broadcast %cst_4 : f32 to vector<8x128xf32>
    %6 = arith.mulf %5, %2 : vector<8x128xf32>
    %7 = arith.select %4, %2, %6 : vector<8x128xi1>, vector<8x128xf32>
    %c0_5 = arith.constant 0 : index
    %c0_6 = arith.constant 0 : index
    %8 = vector.load %arg3[%c0_5, %c0_6] : memref<8x128xf32, #tpu.memory_space<vmem>>, vector<8x128xf32>
    tpu.vector_store %arg3[%c0_5, %c0_6], %7 {strides = array<i32>} : memref<8x128xf32, #tpu.memory_space<vmem>>, vector<8x128xf32>,
    return
  }
  func.func @transform_0(%arg0: i32) -> (i32, i32) {
    %c0_i32 = arith.constant 0 : i32
    %c0_i32_0 = arith.constant 0 : i32
    %c0_i32_1 = arith.constant 0 : i32
    return %c0_i32, %c0_i32_0 : i32, i32
  }
  func.func @transform_1(%arg0: i32) -> (i32, i32) {
    %c0_i32 = arith.constant 0 : i32
    %c0_i32_0 = arith.constant 0 : i32
    return %c0_i32, %arg0 : i32, i32
  }
  func.func @transform_2(%arg0: i32) -> (i32, i32) {
    %c0_i32 = arith.constant 0 : i32
    %c0_i32_0 = arith.constant 0 : i32
    return %c0_i32, %arg0 : i32, i32
  }
}

module attributes {stable_mosaic.version = 11 : i64} {
  func.func @_matmul_lrelu_kernel(%arg0: i32, %arg1: memref<4x256xbf16, #tpu.memory_space<vmem>>, %arg2: memref<256x256xbf16, #tpu.memory_space<vmem>>, %arg3: memref<4x256xf32, #tpu.memory_space<vmem>>) attributes {dimension_semantics = [#tpu.dimension_semantics<parallel>], iteration_bounds = array<i64: 2>, scalar_prefetch = 0 : i64, scratch_operands = 0 : i64, tpu.core_type = #tpu.core_type<tc>, window_params = [{pipeline_mode = #tpu.pipeline_mode<synchronous>, transform_indices = @transform_0, window_bounds = array<i64: 4, 256>}, {transform_indices = @transform_1, window_bounds = array<i64: 256, 256>}, {transform_indices = @transform_2, window_bounds = array<i64: 4, 256>}]} {
    %c0 = arith.constant 0 : index
    %c0_0 = arith.constant 0 : index
    %0 = vector.load %arg1[%c0, %c0_0] : memref<4x256xbf16, #tpu.memory_space<vmem>>, vector<4x256xbf16>
    %c0_1 = arith.constant 0 : index
    %c0_2 = arith.constant 0 : index
    %1 = vector.load %arg2[%c0_1, %c0_2] : memref<256x256xbf16, #tpu.memory_space<vmem>>, vector<256x256xbf16>
    %cst = arith.constant dense<0.000000e+00> : vector<4x256xf32>
    %2 = tpu.matmul %0, %1, %cst {dimension_numbers = #tpu.dot_dimension_numbers<[1], [0], [0], [1], [0, 0, 1, 1], [], []>} : vector<4x256xbf16>, vector<256x256xbf16>, vector<4x256xf32> -> vector<4x256xf32>
    %cst_3 = arith.constant 0.000000e+00 : f32
    %3 = vector.broadcast %cst_3 : f32 to vector<4x256xf32>
    %4 = arith.cmpf oge, %2, %3 : vector<4x256xf32>
    %cst_4 = arith.constant 0.00999999977 : f32
    %5 = vector.broadcast %cst_4 : f32 to vector<4x256xf32>
    %6 = arith.mulf %5, %2 : vector<4x256xf32>
    %7 = arith.select %4, %2, %6 : vector<4x256xi1>, vector<4x256xf32>
    %c0_5 = arith.constant 0 : index
    %c0_6 = arith.constant 0 : index
    %8 = vector.load %arg3[%c0_5, %c0_6] : memref<4x256xf32, #tpu.memory_space<vmem>>, vector<4x256xf32>
    tpu.vector_store %arg3[%c0_5, %c0_6], %7 {strides = array<i32>} : memref<4x256xf32, #tpu.memory_space<vmem>>, vector<4x256xf32>,
    return
  }
  func.func @transform_0(%arg0: i32) -> (i32, i32) {
    %c0_i32 = arith.constant 0 : i32
    %c0_i32_0 = arith.constant 0 : i32
    %c0_i32_1 = arith.constant 0 : i32
    return %c0_i32, %c0_i32_0 : i32, i32
  }
  func.func @transform_1(%arg0: i32) -> (i32, i32) {
    %c0_i32 = arith.constant 0 : i32
    %c0_i32_0 = arith.constant 0 : i32
    return %c0_i32, %arg0 : i32, i32
  }
  func.func @transform_2(%arg0: i32) -> (i32, i32) {
    %c0_i32 = arith.constant 0 : i32
    %c0_i32_0 = arith.constant 0 : i32
    return %c0_i32, %arg0 : i32, i32
  }
}

module attributes {stable_mosaic.version = 11 : i64} {
  func.func @_matmul_lrelu_res_kernel(%arg0: i32, %arg1: memref<4x8xbf16, #tpu.memory_space<vmem>>, %arg2: memref<8x256xbf16, #tpu.memory_space<vmem>>, %arg3: memref<4x256xf32, #tpu.memory_space<vmem>>, %arg4: memref<4x256xf32, #tpu.memory_space<vmem>>) attributes {dimension_semantics = [#tpu.dimension_semantics<parallel>], iteration_bounds = array<i64: 2>, scalar_prefetch = 0 : i64, scratch_operands = 0 : i64, tpu.core_type = #tpu.core_type<tc>, window_params = [{pipeline_mode = #tpu.pipeline_mode<synchronous>, transform_indices = @transform_0, window_bounds = array<i64: 4, 8>}, {transform_indices = @transform_1, window_bounds = array<i64: 8, 256>}, {transform_indices = @transform_2, window_bounds = array<i64: 4, 256>}, {transform_indices = @transform_3, window_bounds = array<i64: 4, 256>}]} {
    %c0 = arith.constant 0 : index
    %c0_0 = arith.constant 0 : index
    %0 = vector.load %arg1[%c0, %c0_0] : memref<4x8xbf16, #tpu.memory_space<vmem>>, vector<4x8xbf16>
    %c0_1 = arith.constant 0 : index
    %c0_2 = arith.constant 0 : index
    %1 = vector.load %arg2[%c0_1, %c0_2] : memref<8x256xbf16, #tpu.memory_space<vmem>>, vector<8x256xbf16>
    %cst = arith.constant dense<0.000000e+00> : vector<4x256xf32>
    %2 = tpu.matmul %0, %1, %cst {dimension_numbers = #tpu.dot_dimension_numbers<[1], [0], [0], [1], [0, 0, 1, 1], [], []>} : vector<4x8xbf16>, vector<8x256xbf16>, vector<4x256xf32> -> vector<4x256xf32>
    %cst_3 = arith.constant 0.000000e+00 : f32
    %3 = vector.broadcast %cst_3 : f32 to vector<4x256xf32>
    %4 = arith.cmpf oge, %2, %3 : vector<4x256xf32>
    %cst_4 = arith.constant 0.00999999977 : f32
    %5 = vector.broadcast %cst_4 : f32 to vector<4x256xf32>
    %6 = arith.mulf %5, %2 : vector<4x256xf32>
    %7 = arith.select %4, %2, %6 : vector<4x256xi1>, vector<4x256xf32>
    %c0_5 = arith.constant 0 : index
    %c0_6 = arith.constant 0 : index
    %8 = vector.load %arg3[%c0_5, %c0_6] : memref<4x256xf32, #tpu.memory_space<vmem>>, vector<4x256xf32>
    %9 = arith.addf %7, %8 : vector<4x256xf32>
    %c0_7 = arith.constant 0 : index
    %c0_8 = arith.constant 0 : index
    %10 = vector.load %arg4[%c0_7, %c0_8] : memref<4x256xf32, #tpu.memory_space<vmem>>, vector<4x256xf32>
    tpu.vector_store %arg4[%c0_7, %c0_8], %9 {strides = array<i32>} : memref<4x256xf32, #tpu.memory_space<vmem>>, vector<4x256xf32>,
    return
  }
  func.func @transform_0(%arg0: i32) -> (i32, i32) {
    %c0_i32 = arith.constant 0 : i32
    %c0_i32_0 = arith.constant 0 : i32
    %c0_i32_1 = arith.constant 0 : i32
    return %c0_i32, %c0_i32_0 : i32, i32
  }
  func.func @transform_1(%arg0: i32) -> (i32, i32) {
    %c0_i32 = arith.constant 0 : i32
    %c0_i32_0 = arith.constant 0 : i32
    return %c0_i32, %arg0 : i32, i32
  }
  func.func @transform_2(%arg0: i32) -> (i32, i32) {
    %c0_i32 = arith.constant 0 : i32
    %c0_i32_0 = arith.constant 0 : i32
    return %c0_i32, %arg0 : i32, i32
  }
  func.func @transform_3(%arg0: i32) -> (i32, i32) {
    %c0_i32 = arith.constant 0 : i32
    %c0_i32_0 = arith.constant 0 : i32
    return %c0_i32, %arg0 : i32, i32
  }
}

</mosaic_0001>

<llo_original>
// kernel: res_block_forward.7
$region0: #{res_block_forward.7}
  #allocation0 [shape = 'u32[]', space=smem, size = 0x4, offset = 0x4, fixed_abs, tag = 'smem constant byte address 0x4 - core index']
  #allocation1 [shape = 'u32[144,128]{1,0:T(1,128)}', space=vmem, size = 0x12000, scoped, tag = 'internal scratch']
  %s0 = inlined_call_operand.vmem [shape: bf16[8,36], index: 0, kind: input, shape index: {}]
  %s1 = inlined_call_operand.vmem [shape: bf16[36,128], index: 1, kind: input, shape index: {}]
  %s2 = inlined_call_operand.vmem [shape: f32[8,128], index: 2, kind: output, shape index: {}]
  %s3 = sld [smem:[#allocation0]]
  $region18: #{res_block_forward.7} parent=0
    _
  %s5 = ssub.s32 1, %s3
  %s6 = scalar_select 0, %s5, %s3
  // Predicated region
  $region2: #{res_block_forward.7} parent=0 // pred_check
    _
  $region3: #{res_block_forward.7} parent=0 // pred_check_branch
    %8 = sbr.rel (0) target = $region5
  $region4: #{res_block_forward.7} parent=0 // pred_region
    _
  $region5: #{res_block_forward.7} parent=0 // pred_fallthru
    _
  // Predicated region
  $region6: #{res_block_forward.7} parent=0 // pred_check
    _
  $region7: #{res_block_forward.7} parent=0 // pred_check_branch
    %10 = sbr.rel (0) target = $region9
  $region8: #{res_block_forward.7} parent=0 // pred_region
    _
  $region9: #{res_block_forward.7} parent=0 // pred_fallthru
    _
  %v12 = vld [vmem:[%s0] sm:$0xf]
  %v13 = vld [vmem:[%s1] sm:$0xf]
  %v14 = vld [vmem:[%s1 + $0x4] sm:$0xf]
  %v15 = vld [vmem:[%s1 + $0x8] sm:$0xf]
  %v16 = vld [vmem:[%s1 + $0xc] sm:$0xf]
  %v17 = vld [vmem:[%s1 + $0x10] sm:$0x3]
  %v23 = vunpack.c.l.b16 %v13
  %v24 = vunpack.c.l.b16 %v14
  %v25 = vunpack.c.l.b16 %v15
  %v26 = vunpack.c.l.b16 %v16
  %v27 = vunpack.c.l.b16 %v17
  %v28 = vpack.c.b16 %v24, %v23
  %v29 = vpack.c.b16 %v26, %v25
  %v30 = vpack.c.b16 %v27, %v27
  %vm33 = vcmask 293888
  %v35 = vsel %vm33, %v12, 0
  %vm37 = vcmask 1041408
  %v39 = vsel %vm37, %v30, 0
  %41 = vmatprep.subr.bf16.mxu0 0
  %42 = vmatpush1.bf16.msra.mxu0 0
  %43 = vmatprep.subr.bf16.mxu0 0
  %44 = vmatpush1.bf16.msra.mxu0 0
  %45 = vmatprep.subr.bf16.mxu0 0
  %46 = vmatpush1.bf16.msra.mxu0 0
  %47 = vmatprep.subr.bf16.mxu0 0
  %48 = vmatpush1.bf16.msra.mxu0 0
  %49 = vmatprep.subr.bf16.mxu0 0
  %50 = vmatpush1.bf16.msra.mxu0 0
  %51 = vmatprep.subr.bf16.mxu0 0
  %52 = vmatpush1.bf16.msra.mxu0 %v39
  %53 = vmatprep.subr.bf16.mxu0 0
  %54 = vmatpush1.bf16.msra.mxu0 %v29
  %55 = vmatprep.subr.bf16.mxu0 0
  %56 = vmatpush1.bf16.msra.mxu0 %v28
  %57 = vmatprep.subr.bf16.mxu0 0
  %58 = vmatpush2.bf16.msra.mxu0 0
  %59 = vmatprep.subr.bf16.mxu0 0
  %60 = vmatpush2.bf16.msra.mxu0 0
  %61 = vmatprep.subr.bf16.mxu0 0
  %62 = vmatpush2.bf16.msra.mxu0 0
  %63 = vmatprep.subr.bf16.mxu0 0
  %64 = vmatpush2.bf16.msra.mxu0 0
  %65 = vmatprep.subr.bf16.mxu0 0
  %66 = vmatpush2.bf16.msra.mxu0 0
  %67 = vmatprep.subr.bf16.mxu0 0
  %68 = vmatpush2.bf16.msra.mxu0 0
  %69 = vmatprep.subr.bf16.mxu0 0
  %70 = vmatpush2.bf16.msra.mxu0 0
  %71 = vmatprep.subr.bf16.mxu0 0
  %72 = vmatpush2.bf16.msra.mxu0 0
  %73 = vmatprep.mubr.bf16.mxu0 0
  %74 = vmatmul.mubr.bf16.gmra.mxu0 %v35
  %v75 = vpop.f32.mrf.mxu0
  %v76 = vadd.f32 0.0, %v75
  %v77 = vpop.f32.mrf.mxu0
  %v78 = vpop.f32.mrf.mxu0
  %v79 = vpop.f32.mrf.mxu0
  %80 = vdwg.mxu0
  %vm81 = vcmp.ge.f32.partialorder %v76, 0.0
  %v82 = vmul.f32 %v76, 0.01
  %v83 = vsel %vm81, %v76, %v82
  %84 = vst [vmem:[%s2] sm:$0xff] %v83
  // Predicated region
  $region10: #{res_block_forward.7} parent=0 // pred_check
    _
  $region11: #{res_block_forward.7} parent=0 // pred_check_branch
    %86 = sbr.rel (0) target = $region13
  $region12: #{res_block_forward.7} parent=0 // pred_region
    _
  $region13: #{res_block_forward.7} parent=0 // pred_fallthru
    _
  // Predicated region
  $region14: #{res_block_forward.7} parent=0 // pred_check
    _
  $region15: #{res_block_forward.7} parent=0 // pred_check_branch
    %88 = sbr.rel (0) target = $region17
  $region16: #{res_block_forward.7} parent=0 // pred_region
    _
  $region17: #{res_block_forward.7} parent=0 // pred_fallthru
    _

// kernel: res_block_forward.8
$region0: #{res_block_forward.8}
  #allocation0 [shape = 'u32[]', space=smem, size = 0x4, offset = 0x4, fixed_abs, tag = 'smem constant byte address 0x4 - core index']
  #allocation1 [shape = 'u32[144,128]{1,0:T(1,128)}', space=vmem, size = 0x12000, scoped, tag = 'internal scratch']
  %s0 = inlined_call_operand.vmem [shape: bf16[16,72], index: 0, kind: input, shape index: {}]
  %s1 = inlined_call_operand.vmem [shape: bf16[72,32], index: 1, kind: input, shape index: {}]
  %s2 = inlined_call_operand.vmem [shape: f32[16,32], index: 2, kind: output, shape index: {}]
  %s3 = sld [smem:[#allocation0]]
  $region18: #{res_block_forward.8} parent=0
    _
  %s5 = ssub.s32 1, %s3
  %s6 = scalar_select 0, %s5, %s3
  // Predicated region
  $region2: #{res_block_forward.8} parent=0 // pred_check
    _
  $region3: #{res_block_forward.8} parent=0 // pred_check_branch
    %8 = sbr.rel (0) target = $region5
  $region4: #{res_block_forward.8} parent=0 // pred_region
    _
  $region5: #{res_block_forward.8} parent=0 // pred_fallthru
    _
  // Predicated region
  $region6: #{res_block_forward.8} parent=0 // pred_check
    _
  $region7: #{res_block_forward.8} parent=0 // pred_check_branch
    %10 = sbr.rel (0) target = $region9
  $region8: #{res_block_forward.8} parent=0 // pred_region
    _
  $region9: #{res_block_forward.8} parent=0 // pred_fallthru
    _
  %v12 = vld [vmem:[%s0] sm:$0xf]
  %v13 = vld [vmem:[%s0 + $0x4] sm:$0xf]
  %v14 = vld [vmem:[%s1] sm:$0xf]
  %v15 = vld [vmem:[%s1 + $0x4] sm:$0xf]
  %v16 = vld [vmem:[%s1 + $0x8] sm:$0xf]
  %v17 = vld [vmem:[%s1 + $0xc] sm:$0xf]
  %v18 = vld [vmem:[%s1 + $0x10] sm:$0xf]
  %v19 = vld [vmem:[%s1 + $0x14] sm:$0xf]
  %v20 = vld [vmem:[%s1 + $0x18] sm:$0xf]
  %v21 = vld [vmem:[%s1 + $0x1c] sm:$0xf]
  %v22 = vld [vmem:[%s1 + $0x20] sm:$0xf]
  %v25 = vunpack.c.l.b16 %v12
  %v26 = vunpack.c.l.b16 %v13
  %v27 = vpack.c.b16 %v26, %v25
  %v37 = vunpack.c.l.b16 %v14
  %v38 = vunpack.c.l.b16 %v15
  %v39 = vunpack.c.l.b16 %v16
  %v40 = vunpack.c.l.b16 %v17
  %v41 = vunpack.c.l.b16 %v18
  %v42 = vunpack.c.l.b16 %v19
  %v43 = vunpack.c.l.b16 %v20
  %v44 = vunpack.c.l.b16 %v21
  %v45 = vunpack.c.l.b16 %v22
  %v46 = vpack.c.b16 %v38, %v37
  %v47 = vpack.c.b16 %v40, %v39
  %v48 = vpack.c.b16 %v42, %v41
  %v49 = vpack.c.b16 %v44, %v43
  %v50 = vpack.c.b16 %v45, %v45
  %vm55 = vcmask 588800
  %v57 = vsel %vm55, %v27, 0
  %vm59 = vcmask 1043456
  %v61 = vsel %vm59, %v50, 0
  %63 = vmatprep.subr.bf16.mxu0 0
  %64 = vmatpush1.bf16.msra.mxu0 0
  %65 = vmatprep.subr.bf16.mxu0 0
  %66 = vmatpush1.bf16.msra.mxu0 0
  %67 = vmatprep.subr.bf16.mxu0 0
  %68 = vmatpush1.bf16.msra.mxu0 0
  %69 = vmatprep.subr.bf16.mxu0 0
  %70 = vmatpush1.bf16.msra.mxu0 %v61
  %71 = vmatprep.subr.bf16.mxu0 0
  %72 = vmatpush1.bf16.msra.mxu0 %v49
  %73 = vmatprep.subr.bf16.mxu0 0
  %74 = vmatpush1.bf16.msra.mxu0 %v48
  %75 = vmatprep.subr.bf16.mxu0 0
  %76 = vmatpush1.bf16.msra.mxu0 %v47
  %77 = vmatprep.subr.bf16.mxu0 0
  %78 = vmatpush1.bf16.msra.mxu0 %v46
  %79 = vmatprep.subr.bf16.mxu0 0
  %80 = vmatpush2.bf16.msra.mxu0 0
  %81 = vmatprep.subr.bf16.mxu0 0
  %82 = vmatpush2.bf16.msra.mxu0 0
  %83 = vmatprep.subr.bf16.mxu0 0
  %84 = vmatpush2.bf16.msra.mxu0 0
  %85 = vmatprep.subr.bf16.mxu0 0
  %86 = vmatpush2.bf16.msra.mxu0 0
  %87 = vmatprep.subr.bf16.mxu0 0
  %88 = vmatpush2.bf16.msra.mxu0 0
  %89 = vmatprep.subr.bf16.mxu0 0
  %90 = vmatpush2.bf16.msra.mxu0 0
  %91 = vmatprep.subr.bf16.mxu0 0
  %92 = vmatpush2.bf16.msra.mxu0 0
  %93 = vmatprep.subr.bf16.mxu0 0
  %94 = vmatpush2.bf16.msra.mxu0 0
  %95 = vmatprep.mubr.bf16.mxu0 0
  %96 = vmatmul.mubr.bf16.gmra.mxu0 %v57
  %v97 = vpop.f32.mrf.mxu0
  %v98 = vadd.f32 0.0, %v97
  %v99 = vpop.f32.mrf.mxu0
  %v100 = vpop.f32.mrf.mxu0
  %v101 = vadd.f32 0.0, %v100
  %v102 = vpop.f32.mrf.mxu0
  %103 = vdwg.mxu0
  %vm104 = vcmp.ge.f32.partialorder %v98, 0.0
  %vm105 = vcmp.ge.f32.partialorder %v101, 0.0
  %v106 = vmul.f32 %v98, 0.01
  %v107 = vmul.f32 %v101, 0.01
  %v108 = vsel %vm104, %v98, %v106
  %v109 = vsel %vm105, %v101, %v107
  %vm110 = vcmask 261120
  %111 = vst.msk [vmem:[%s2] sm:$0xff] %vm110, %v108
  %112 = vst.msk [vmem:[%s2 + $0x8] sm:$0xff] %vm110, %v109
  // Predicated region
  $region10: #{res_block_forward.8} parent=0 // pred_check
    _
  $region11: #{res_block_forward.8} parent=0 // pred_check_branch
    %114 = sbr.rel (0) target = $region13
  $region12: #{res_block_forward.8} parent=0 // pred_region
    _
  $region13: #{res_block_forward.8} parent=0 // pred_fallthru
    _
  // Predicated region
  $region14: #{res_block_forward.8} parent=0 // pred_check
    _
  $region15: #{res_block_forward.8} parent=0 // pred_check_branch
    %116 = sbr.rel (0) target = $region17
  $region16: #{res_block_forward.8} parent=0 // pred_region
    _
  $region17: #{res_block_forward.8} parent=0 // pred_fallthru
    _

// kernel: res_block_forward.9
$region0: #{res_block_forward.9}
  #allocation0 [shape = 'u32[]', space=smem, size = 0x4, offset = 0x4, fixed_abs, tag = 'smem constant byte address 0x4 - core index']
  #allocation1 [shape = 'u32[144,128]{1,0:T(1,128)}', space=vmem, size = 0x12000, scoped, tag = 'internal scratch']
  %s0 = inlined_call_operand.vmem [shape: bf16[32,144], index: 0, kind: input, shape index: {}]
  %s1 = inlined_call_operand.vmem [shape: bf16[144,8], index: 1, kind: input, shape index: {}]
  %s2 = inlined_call_operand.vmem [shape: f32[32,8], index: 2, kind: output, shape index: {}]
  %s3 = sld [smem:[#allocation0]]
  $region18: #{res_block_forward.9} parent=0
    _
  %s5 = ssub.s32 1, %s3
  %s6 = scalar_select 0, %s5, %s3
  // Predicated region
  $region2: #{res_block_forward.9} parent=0 // pred_check
    _
  $region3: #{res_block_forward.9} parent=0 // pred_check_branch
    %8 = sbr.rel (0) target = $region5
  $region4: #{res_block_forward.9} parent=0 // pred_region
    _
  $region5: #{res_block_forward.9} parent=0 // pred_fallthru
    _
  // Predicated region
  $region6: #{res_block_forward.9} parent=0 // pred_check
    _
  $region7: #{res_block_forward.9} parent=0 // pred_check_branch
    %10 = sbr.rel (0) target = $region9
  $region8: #{res_block_forward.9} parent=0 // pred_region
    _
  $region9: #{res_block_forward.9} parent=0 // pred_fallthru
    _
  %v12 = vld [vmem:[%s0] sm:$0xff]
  %v13 = vld [vmem:[%s0 + $0x8] sm:$0xff]
  %v14 = vld [vmem:[%s0 + $0x10] sm:$0xff]
  %v15 = vld [vmem:[%s0 + $0x18] sm:$0xff]
  %v16 = vld [vmem:[%s1] sm:$0xf]
  %v17 = vld [vmem:[%s1 + $0x4] sm:$0xf]
  %v18 = vld [vmem:[%s1 + $0x8] sm:$0xf]
  %v19 = vld [vmem:[%s1 + $0xc] sm:$0xf]
  %v20 = vld [vmem:[%s1 + $0x10] sm:$0xf]
  %v21 = vld [vmem:[%s1 + $0x14] sm:$0xf]
  %v22 = vld [vmem:[%s1 + $0x18] sm:$0xf]
  %v23 = vld [vmem:[%s1 + $0x1c] sm:$0xf]
  %v24 = vld [vmem:[%s1 + $0x20] sm:$0xf]
  %v25 = vld [vmem:[%s1 + $0x24] sm:$0xf]
  %v26 = vld [vmem:[%s1 + $0x28] sm:$0xf]
  %v27 = vld [vmem:[%s1 + $0x2c] sm:$0xf]
  %v28 = vld [vmem:[%s1 + $0x30] sm:$0xf]
  %v29 = vld [vmem:[%s1 + $0x34] sm:$0xf]
  %v30 = vld [vmem:[%s1 + $0x38] sm:$0xf]
  %v31 = vld [vmem:[%s1 + $0x3c] sm:$0xf]
  %v32 = vld [vmem:[%s1 + $0x40] sm:$0xf]
  %v33 = vld [vmem:[%s1 + $0x44] sm:$0xf]
  %v38 = vunpack.c.l.b16 %v12
  %v39 = vunpack.c.h.b16 %v12
  %v40 = vunpack.c.l.b16 %v13
  %v41 = vunpack.c.h.b16 %v13
  %v42 = vunpack.c.l.b16 %v14
  %v43 = vunpack.c.h.b16 %v14
  %v44 = vunpack.c.l.b16 %v15
  %v45 = vunpack.c.h.b16 %v15
  %v46 = vpack.c.b16 %v40, %v38
  %v47 = vpack.c.b16 %v41, %v39
  %v48 = vpack.c.b16 %v44, %v42
  %v49 = vpack.c.b16 %v45, %v43
  %v70 = vunpack.c.l.b16 %v16
  %v71 = vunpack.c.l.b16 %v17
  %v72 = vunpack.c.l.b16 %v18
  %v73 = vunpack.c.l.b16 %v19
  %v74 = vunpack.c.l.b16 %v20
  %v75 = vunpack.c.l.b16 %v21
  %v76 = vunpack.c.l.b16 %v22
  %v77 = vunpack.c.l.b16 %v23
  %v78 = vunpack.c.l.b16 %v24
  %v79 = vunpack.c.l.b16 %v25
  %v80 = vunpack.c.l.b16 %v26
  %v81 = vunpack.c.l.b16 %v27
  %v82 = vunpack.c.l.b16 %v28
  %v83 = vunpack.c.l.b16 %v29
  %v84 = vunpack.c.l.b16 %v30
  %v85 = vunpack.c.l.b16 %v31
  %v86 = vunpack.c.l.b16 %v32
  %v87 = vunpack.c.l.b16 %v33
  %v88 = vpack.c.b16 %v71, %v70
  %v89 = vpack.c.b16 %v73, %v72
  %v90 = vpack.c.b16 %v75, %v74
  %v91 = vpack.c.b16 %v77, %v76
  %v92 = vpack.c.b16 %v79, %v78
  %v93 = vpack.c.b16 %v81, %v80
  %v94 = vpack.c.b16 %v83, %v82
  %v95 = vpack.c.b16 %v85, %v84
  %v96 = vpack.c.b16 %v87, %v86
  %vm106 = vcmask 130048
  %v108 = vsel %vm106, %v47, 0
  %v111 = vsel %vm106, %v49, 0
  %113 = vmatprep.subr.bf16.mxu0 0
  %114 = vmatpush1.bf16.msra.mxu0 %v95
  %115 = vmatprep.subr.bf16.mxu0 0
  %116 = vmatpush1.bf16.msra.mxu0 %v94
  %117 = vmatprep.subr.bf16.mxu0 0
  %118 = vmatpush1.bf16.msra.mxu0 %v93
  %119 = vmatprep.subr.bf16.mxu0 0
  %120 = vmatpush1.bf16.msra.mxu0 %v92
  %121 = vmatprep.subr.bf16.mxu0 0
  %122 = vmatpush1.bf16.msra.mxu0 %v91
  %123 = vmatprep.subr.bf16.mxu0 0
  %124 = vmatpush1.bf16.msra.mxu0 %v90
  %125 = vmatprep.subr.bf16.mxu0 0
  %126 = vmatpush1.bf16.msra.mxu0 %v89
  %127 = vmatprep.subr.bf16.mxu0 0
  %128 = vmatpush1.bf16.msra.mxu0 %v88
  %129 = vmatprep.subr.bf16.mxu0 0
  %130 = vmatpush2.bf16.msra.mxu0 0
  %131 = vmatprep.subr.bf16.mxu0 0
  %132 = vmatpush2.bf16.msra.mxu0 0
  %133 = vmatprep.subr.bf16.mxu0 0
  %134 = vmatpush2.bf16.msra.mxu0 0
  %135 = vmatprep.subr.bf16.mxu0 0
  %136 = vmatpush2.bf16.msra.mxu0 0
  %137 = vmatprep.subr.bf16.mxu0 0
  %138 = vmatpush2.bf16.msra.mxu0 0
  %139 = vmatprep.subr.bf16.mxu0 0
  %140 = vmatpush2.bf16.msra.mxu0 0
  %141 = vmatprep.subr.bf16.mxu0 0
  %142 = vmatpush2.bf16.msra.mxu0 0
  %143 = vmatprep.subr.bf16.mxu0 0
  %144 = vmatpush2.bf16.msra.mxu0 %v96
  %145 = vmatprep.mubr.bf16.mxu0 %v108
  %146 = vmatmul.mubr.bf16.gmra.mxu0 %v46
  %v147 = vpop.f32.mrf.mxu0
  %v148 = vadd.f32 0.0, %v147
  %v149 = vpop.f32.mrf.mxu0
  %v150 = vpop.f32.mrf.mxu0
  %v151 = vadd.f32 0.0, %v150
  %v152 = vpop.f32.mrf.mxu0
  %153 = vmatprep.mubr.bf16.mxu0 %v111
  %154 = vmatmul.mubr.bf16.gmra.mxu0 %v48
  %v155 = vpop.f32.mrf.mxu0
  %v156 = vadd.f32 0.0, %v155
  %v157 = vpop.f32.mrf.mxu0
  %v158 = vpop.f32.mrf.mxu0
  %v159 = vadd.f32 0.0, %v158
  %v160 = vpop.f32.mrf.mxu0
  %161 = vdwg.mxu0
  %vm162 = vcmp.ge.f32.partialorder %v148, 0.0
  %vm163 = vcmp.ge.f32.partialorder %v151, 0.0
  %vm164 = vcmp.ge.f32.partialorder %v156, 0.0
  %vm165 = vcmp.ge.f32.partialorder %v159, 0.0
  %v166 = vmul.f32 %v148, 0.01
  %v167 = vmul.f32 %v151, 0.01
  %v168 = vmul.f32 %v156, 0.01
  %v169 = vmul.f32 %v159, 0.01
  %v170 = vsel %vm162, %v148, %v166
  %v171 = vsel %vm163, %v151, %v167
  %v172 = vsel %vm164, %v156, %v168
  %v173 = vsel %vm165, %v159, %v169
  %vm174 = vcmask 64512
  %175 = vst.msk [vmem:[%s2] sm:$0xff] %vm174, %v170
  %176 = vst.msk [vmem:[%s2 + $0x8] sm:$0xff] %vm174, %v171
  %177 = vst.msk [vmem:[%s2 + $0x10] sm:$0xff] %vm174, %v172
  %178 = vst.msk [vmem:[%s2 + $0x18] sm:$0xff] %vm174, %v173
  // Predicated region
  $region10: #{res_block_forward.9} parent=0 // pred_check
    _
  $region11: #{res_block_forward.9} parent=0 // pred_check_branch
    %180 = sbr.rel (0) target = $region13
  $region12: #{res_block_forward.9} parent=0 // pred_region
    _
  $region13: #{res_block_forward.9} parent=0 // pred_fallthru
    _
  // Predicated region
  $region14: #{res_block_forward.9} parent=0 // pred_check
    _
  $region15: #{res_block_forward.9} parent=0 // pred_check_branch
    %182 = sbr.rel (0) target = $region17
  $region16: #{res_block_forward.9} parent=0 // pred_region
    _
  $region17: #{res_block_forward.9} parent=0 // pred_fallthru
    _

// kernel: res_block_forward.10
$region0: #{res_block_forward.10}
  #allocation0 [shape = 'u32[]', space=smem, size = 0x4, offset = 0x4, fixed_abs, tag = 'smem constant byte address 0x4 - core index']
  #allocation1 [shape = 'u32[144,128]{1,0:T(1,128)}', space=vmem, size = 0x12000, scoped, tag = 'internal scratch']
  %s0 = inlined_call_operand.vmem [shape: bf16[16,512], index: 0, kind: input, shape index: {}]
  %s1 = inlined_call_operand.vmem [shape: bf16[512,32], index: 1, kind: input, shape index: {}]
  %s2 = inlined_call_operand.vmem [shape: f32[16,32], index: 2, kind: output, shape index: {}]
  %s3 = sld [smem:[#allocation0]]
  $region18: #{res_block_forward.10} parent=0
    _
  %s5 = ssub.s32 1, %s3
  %s6 = scalar_select 0, %s5, %s3
  // Predicated region
  $region2: #{res_block_forward.10} parent=0 // pred_check
    _
  $region3: #{res_block_forward.10} parent=0 // pred_check_branch
    %8 = sbr.rel (0) target = $region5
  $region4: #{res_block_forward.10} parent=0 // pred_region
    _
  $region5: #{res_block_forward.10} parent=0 // pred_fallthru
    _
  // Predicated region
  $region6: #{res_block_forward.10} parent=0 // pred_check
    _
  $region7: #{res_block_forward.10} parent=0 // pred_check_branch
    %10 = sbr.rel (0) target = $region9
  $region8: #{res_block_forward.10} parent=0 // pred_region
    _
  $region9: #{res_block_forward.10} parent=0 // pred_fallthru
    _
  %v12 = vld [vmem:[%s0] sm:$0xff]
  %v13 = vld [vmem:[%s0 + $0x8] sm:$0xff]
  %v14 = vld [vmem:[%s0 + $0x10] sm:$0xff]
  %v15 = vld [vmem:[%s0 + $0x18] sm:$0xff]
  %v16 = vld [vmem:[%s1] sm:$0xf]
  %v17 = vld [vmem:[%s1 + $0x4] sm:$0xf]
  %v18 = vld [vmem:[%s1 + $0x8] sm:$0xf]
  %v19 = vld [vmem:[%s1 + $0xc] sm:$0xf]
  %v20 = vld [vmem:[%s1 + $0x10] sm:$0xf]
  %v21 = vld [vmem:[%s1 + $0x14] sm:$0xf]
  %v22 = vld [vmem:[%s1 + $0x18] sm:$0xf]
  %v23 = vld [vmem:[%s1 + $0x1c] sm:$0xf]
  %v24 = vld [vmem:[%s1 + $0x20] sm:$0xf]
  %v25 = vld [vmem:[%s1 + $0x24] sm:$0xf]
  %v26 = vld [vmem:[%s1 + $0x28] sm:$0xf]
  %v27 = vld [vmem:[%s1 + $0x2c] sm:$0xf]
  %v28 = vld [vmem:[%s1 + $0x30] sm:$0xf]
  %v29 = vld [vmem:[%s1 + $0x34] sm:$0xf]
  %v30 = vld [vmem:[%s1 + $0x38] sm:$0xf]
  %v31 = vld [vmem:[%s1 + $0x3c] sm:$0xf]
  %v32 = vld [vmem:[%s1 + $0x40] sm:$0xf]
  %v33 = vld [vmem:[%s1 + $0x44] sm:$0xf]
  %v34 = vld [vmem:[%s1 + $0x48] sm:$0xf]
  %v35 = vld [vmem:[%s1 + $0x4c] sm:$0xf]
  %v36 = vld [vmem:[%s1 + $0x50] sm:$0xf]
  %v37 = vld [vmem:[%s1 + $0x54] sm:$0xf]
  %v38 = vld [vmem:[%s1 + $0x58] sm:$0xf]
  %v39 = vld [vmem:[%s1 + $0x5c] sm:$0xf]
  %v40 = vld [vmem:[%s1 + $0x60] sm:$0xf]
  %v41 = vld [vmem:[%s1 + $0x64] sm:$0xf]
  %v42 = vld [vmem:[%s1 + $0x68] sm:$0xf]
  %v43 = vld [vmem:[%s1 + $0x6c] sm:$0xf]
  %v44 = vld [vmem:[%s1 + $0x70] sm:$0xf]
  %v45 = vld [vmem:[%s1 + $0x74] sm:$0xf]
  %v46 = vld [vmem:[%s1 + $0x78] sm:$0xf]
  %v47 = vld [vmem:[%s1 + $0x7c] sm:$0xf]
  %v48 = vld [vmem:[%s1 + $0x80] sm:$0xf]
  %v49 = vld [vmem:[%s1 + $0x84] sm:$0xf]
  %v50 = vld [vmem:[%s1 + $0x88] sm:$0xf]
  %v51 = vld [vmem:[%s1 + $0x8c] sm:$0xf]
  %v52 = vld [vmem:[%s1 + $0x90] sm:$0xf]
  %v53 = vld [vmem:[%s1 + $0x94] sm:$0xf]
  %v54 = vld [vmem:[%s1 + $0x98] sm:$0xf]
  %v55 = vld [vmem:[%s1 + $0x9c] sm:$0xf]
  %v56 = vld [vmem:[%s1 + $0xa0] sm:$0xf]
  %v57 = vld [vmem:[%s1 + $0xa4] sm:$0xf]
  %v58 = vld [vmem:[%s1 + $0xa8] sm:$0xf]
  %v59 = vld [vmem:[%s1 + $0xac] sm:$0xf]
  %v60 = vld [vmem:[%s1 + $0xb0] sm:$0xf]
  %v61 = vld [vmem:[%s1 + $0xb4] sm:$0xf]
  %v62 = vld [vmem:[%s1 + $0xb8] sm:$0xf]
  %v63 = vld [vmem:[%s1 + $0xbc] sm:$0xf]
  %v64 = vld [vmem:[%s1 + $0xc0] sm:$0xf]
  %v65 = vld [vmem:[%s1 + $0xc4] sm:$0xf]
  %v66 = vld [vmem:[%s1 + $0xc8] sm:$0xf]
  %v67 = vld [vmem:[%s1 + $0xcc] sm:$0xf]
  %v68 = vld [vmem:[%s1 + $0xd0] sm:$0xf]
  %v69 = vld [vmem:[%s1 + $0xd4] sm:$0xf]
  %v70 = vld [vmem:[%s1 + $0xd8] sm:$0xf]
  %v71 = vld [vmem:[%s1 + $0xdc] sm:$0xf]
  %v72 = vld [vmem:[%s1 + $0xe0] sm:$0xf]
  %v73 = vld [vmem:[%s1 + $0xe4] sm:$0xf]
  %v74 = vld [vmem:[%s1 + $0xe8] sm:$0xf]
  %v75 = vld [vmem:[%s1 + $0xec] sm:$0xf]
  %v76 = vld [vmem:[%s1 + $0xf0] sm:$0xf]
  %v77 = vld [vmem:[%s1 + $0xf4] sm:$0xf]
  %v78 = vld [vmem:[%s1 + $0xf8] sm:$0xf]
  %v79 = vld [vmem:[%s1 + $0xfc] sm:$0xf]
  %v84 = vunpack.c.l.b16 %v12
  %v85 = vunpack.c.h.b16 %v12
  %v86 = vunpack.c.l.b16 %v13
  %v87 = vunpack.c.h.b16 %v13
  %v88 = vunpack.c.l.b16 %v14
  %v89 = vunpack.c.h.b16 %v14
  %v90 = vunpack.c.l.b16 %v15
  %v91 = vunpack.c.h.b16 %v15
  %v92 = vpack.c.b16 %v88, %v84
  %v93 = vpack.c.b16 %v89, %v85
  %v94 = vpack.c.b16 %v90, %v86
  %v95 = vpack.c.b16 %v91, %v87
  %v164 = vunpack.c.l.b16 %v16
  %v165 = vunpack.c.l.b16 %v17
  %v166 = vunpack.c.l.b16 %v18
  %v167 = vunpack.c.l.b16 %v19
  %v168 = vunpack.c.l.b16 %v20
  %v169 = vunpack.c.l.b16 %v21
  %v170 = vunpack.c.l.b16 %v22
  %v171 = vunpack.c.l.b16 %v23
  %v172 = vunpack.c.l.b16 %v24
  %v173 = vunpack.c.l.b16 %v25
  %v174 = vunpack.c.l.b16 %v26
  %v175 = vunpack.c.l.b16 %v27
  %v176 = vunpack.c.l.b16 %v28
  %v177 = vunpack.c.l.b16 %v29
  %v178 = vunpack.c.l.b16 %v30
  %v179 = vunpack.c.l.b16 %v31
  %v180 = vunpack.c.l.b16 %v32
  %v181 = vunpack.c.l.b16 %v33
  %v182 = vunpack.c.l.b16 %v34
  %v183 = vunpack.c.l.b16 %v35
  %v184 = vunpack.c.l.b16 %v36
  %v185 = vunpack.c.l.b16 %v37
  %v186 = vunpack.c.l.b16 %v38
  %v187 = vunpack.c.l.b16 %v39
  %v188 = vunpack.c.l.b16 %v40
  %v189 = vunpack.c.l.b16 %v41
  %v190 = vunpack.c.l.b16 %v42
  %v191 = vunpack.c.l.b16 %v43
  %v192 = vunpack.c.l.b16 %v44
  %v193 = vunpack.c.l.b16 %v45
  %v194 = vunpack.c.l.b16 %v46
  %v195 = vunpack.c.l.b16 %v47
  %v196 = vunpack.c.l.b16 %v48
  %v197 = vunpack.c.l.b16 %v49
  %v198 = vunpack.c.l.b16 %v50
  %v199 = vunpack.c.l.b16 %v51
  %v200 = vunpack.c.l.b16 %v52
  %v201 = vunpack.c.l.b16 %v53
  %v202 = vunpack.c.l.b16 %v54
  %v203 = vunpack.c.l.b16 %v55
  %v204 = vunpack.c.l.b16 %v56
  %v205 = vunpack.c.l.b16 %v57
  %v206 = vunpack.c.l.b16 %v58
  %v207 = vunpack.c.l.b16 %v59
  %v208 = vunpack.c.l.b16 %v60
  %v209 = vunpack.c.l.b16 %v61
  %v210 = vunpack.c.l.b16 %v62
  %v211 = vunpack.c.l.b16 %v63
  %v212 = vunpack.c.l.b16 %v64
  %v213 = vunpack.c.l.b16 %v65
  %v214 = vunpack.c.l.b16 %v66
  %v215 = vunpack.c.l.b16 %v67
  %v216 = vunpack.c.l.b16 %v68
  %v217 = vunpack.c.l.b16 %v69
  %v218 = vunpack.c.l.b16 %v70
  %v219 = vunpack.c.l.b16 %v71
  %v220 = vunpack.c.l.b16 %v72
  %v221 = vunpack.c.l.b16 %v73
  %v222 = vunpack.c.l.b16 %v74
  %v223 = vunpack.c.l.b16 %v75
  %v224 = vunpack.c.l.b16 %v76
  %v225 = vunpack.c.l.b16 %v77
  %v226 = vunpack.c.l.b16 %v78
  %v227 = vunpack.c.l.b16 %v79
  %v228 = vpack.c.b16 %v165, %v164
  %v229 = vpack.c.b16 %v167, %v166
  %v230 = vpack.c.b16 %v169, %v168
  %v231 = vpack.c.b16 %v171, %v170
  %v232 = vpack.c.b16 %v173, %v172
  %v233 = vpack.c.b16 %v175, %v174
  %v234 = vpack.c.b16 %v177, %v176
  %v235 = vpack.c.b16 %v179, %v178
  %v236 = vpack.c.b16 %v181, %v180
  %v237 = vpack.c.b16 %v183, %v182
  %v238 = vpack.c.b16 %v185, %v184
  %v239 = vpack.c.b16 %v187, %v186
  %v240 = vpack.c.b16 %v189, %v188
  %v241 = vpack.c.b16 %v191, %v190
  %v242 = vpack.c.b16 %v193, %v192
  %v243 = vpack.c.b16 %v195, %v194
  %v244 = vpack.c.b16 %v197, %v196
  %v245 = vpack.c.b16 %v199, %v198
  %v246 = vpack.c.b16 %v201, %v200
  %v247 = vpack.c.b16 %v203, %v202
  %v248 = vpack.c.b16 %v205, %v204
  %v249 = vpack.c.b16 %v207, %v206
  %v250 = vpack.c.b16 %v209, %v208
  %v251 = vpack.c.b16 %v211, %v210
  %v252 = vpack.c.b16 %v213, %v212
  %v253 = vpack.c.b16 %v215, %v214
  %v254 = vpack.c.b16 %v217, %v216
  %v255 = vpack.c.b16 %v219, %v218
  %v256 = vpack.c.b16 %v221, %v220
  %v257 = vpack.c.b16 %v223, %v222
  %v258 = vpack.c.b16 %v225, %v224
  %v259 = vpack.c.b16 %v227, %v226
  %292 = vmatprep.subr.bf16.mxu0 0
  %293 = vmatpush1.bf16.msra.mxu0 %v235
  %294 = vmatprep.subr.bf16.mxu0 0
  %295 = vmatpush1.bf16.msra.mxu0 %v234
  %296 = vmatprep.subr.bf16.mxu0 0
  %297 = vmatpush1.bf16.msra.mxu0 %v233
  %298 = vmatprep.subr.bf16.mxu0 0
  %299 = vmatpush1.bf16.msra.mxu0 %v232
  %300 = vmatprep.subr.bf16.mxu0 0
  %301 = vmatpush1.bf16.msra.mxu0 %v231
  %302 = vmatprep.subr.bf16.mxu0 0
  %303 = vmatpush1.bf16.msra.mxu0 %v230
  %304 = vmatprep.subr.bf16.mxu0 0
  %305 = vmatpush1.bf16.msra.mxu0 %v229
  %306 = vmatprep.subr.bf16.mxu0 0
  %307 = vmatpush1.bf16.msra.mxu0 %v228
  %308 = vmatprep.subr.bf16.mxu0 0
  %309 = vmatpush2.bf16.msra.mxu0 %v243
  %310 = vmatprep.subr.bf16.mxu0 0
  %311 = vmatpush2.bf16.msra.mxu0 %v242
  %312 = vmatprep.subr.bf16.mxu0 0
  %313 = vmatpush2.bf16.msra.mxu0 %v241
  %314 = vmatprep.subr.bf16.mxu0 0
  %315 = vmatpush2.bf16.msra.mxu0 %v240
  %316 = vmatprep.subr.bf16.mxu0 0
  %317 = vmatpush2.bf16.msra.mxu0 %v239
  %318 = vmatprep.subr.bf16.mxu0 0
  %319 = vmatpush2.bf16.msra.mxu0 %v238
  %320 = vmatprep.subr.bf16.mxu0 0
  %321 = vmatpush2.bf16.msra.mxu0 %v237
  %322 = vmatprep.subr.bf16.mxu0 0
  %323 = vmatpush2.bf16.msra.mxu0 %v236
  %324 = vmatprep.mubr.bf16.mxu0 %v93
  %325 = vmatmul.mubr.bf16.gmra.mxu0 %v92
  %v326 = vpop.f32.mrf.mxu0
  %v327 = vadd.f32 0.0, %v326
  %v328 = vpop.f32.mrf.mxu0
  %v329 = vpop.f32.mrf.mxu0
  %v330 = vadd.f32 0.0, %v329
  %v331 = vpop.f32.mrf.mxu0
  %332 = vdwg.mxu0
  %333 = vmatprep.subr.bf16.mxu0 0
  %334 = vmatpush1.bf16.msra.mxu0 %v251
  %335 = vmatprep.subr.bf16.mxu0 0
  %336 = vmatpush1.bf16.msra.mxu0 %v250
  %337 = vmatprep.subr.bf16.mxu0 0
  %338 = vmatpush1.bf16.msra.mxu0 %v249
  %339 = vmatprep.subr.bf16.mxu0 0
  %340 = vmatpush1.bf16.msra.mxu0 %v248
  %341 = vmatprep.subr.bf16.mxu0 0
  %342 = vmatpush1.bf16.msra.mxu0 %v247
  %343 = vmatprep.subr.bf16.mxu0 0
  %344 = vmatpush1.bf16.msra.mxu0 %v246
  %345 = vmatprep.subr.bf16.mxu0 0
  %346 = vmatpush1.bf16.msra.mxu0 %v245
  %347 = vmatprep.subr.bf16.mxu0 0
  %348 = vmatpush1.bf16.msra.mxu0 %v244
  %349 = vmatprep.subr.bf16.mxu0 0
  %350 = vmatpush2.bf16.msra.mxu0 %v259
  %351 = vmatprep.subr.bf16.mxu0 0
  %352 = vmatpush2.bf16.msra.mxu0 %v258
  %353 = vmatprep.subr.bf16.mxu0 0
  %354 = vmatpush2.bf16.msra.mxu0 %v257
  %355 = vmatprep.subr.bf16.mxu0 0
  %356 = vmatpush2.bf16.msra.mxu0 %v256
  %357 = vmatprep.subr.bf16.mxu0 0
  %358 = vmatpush2.bf16.msra.mxu0 %v255
  %359 = vmatprep.subr.bf16.mxu0 0
  %360 = vmatpush2.bf16.msra.mxu0 %v254
  %361 = vmatprep.subr.bf16.mxu0 0
  %362 = vmatpush2.bf16.msra.mxu0 %v253
  %363 = vmatprep.subr.bf16.mxu0 0
  %364 = vmatpush2.bf16.msra.mxu0 %v252
  %365 = vmatprep.mubr.bf16.mxu0 %v95
  %366 = vmatmul.mubr.bf16.gmra.mxu0 %v94
  %v367 = vpop.f32.mrf.mxu0
  %v368 = vadd.f32 %v327, %v367
  %v369 = vpop.f32.mrf.mxu0
  %v370 = vpop.f32.mrf.mxu0
  %v371 = vadd.f32 %v330, %v370
  %v372 = vpop.f32.mrf.mxu0
  %373 = vdwg.mxu0
  %vm374 = vcmp.ge.f32.partialorder %v368, 0.0
  %vm375 = vcmp.ge.f32.partialorder %v371, 0.0
  %v376 = vmul.f32 %v368, 0.01
  %v377 = vmul.f32 %v371, 0.01
  %v378 = vsel %vm374, %v368, %v376
  %v379 = vsel %vm375, %v371, %v377
  %vm380 = vcmask 261120
  %381 = vst.msk [vmem:[%s2] sm:$0xff] %vm380, %v378
  %382 = vst.msk [vmem:[%s2 + $0x8] sm:$0xff] %vm380, %v379
  // Predicated region
  $region10: #{res_block_forward.10} parent=0 // pred_check
    _
  $region11: #{res_block_forward.10} parent=0 // pred_check_branch
    %384 = sbr.rel (0) target = $region13
  $region12: #{res_block_forward.10} parent=0 // pred_region
    _
  $region13: #{res_block_forward.10} parent=0 // pred_fallthru
    _
  // Predicated region
  $region14: #{res_block_forward.10} parent=0 // pred_check
    _
  $region15: #{res_block_forward.10} parent=0 // pred_check_branch
    %386 = sbr.rel (0) target = $region17
  $region16: #{res_block_forward.10} parent=0 // pred_region
    _
  $region17: #{res_block_forward.10} parent=0 // pred_fallthru
    _

// kernel: res_block_forward.11
$region0: #{res_block_forward.11}
  #allocation0 [shape = 'u32[]', space=smem, size = 0x4, offset = 0x4, fixed_abs, tag = 'smem constant byte address 0x4 - core index']
  #allocation1 [shape = 'u32[144,128]{1,0:T(1,128)}', space=vmem, size = 0x12000, scoped, tag = 'internal scratch']
  %s0 = inlined_call_operand.vmem [shape: bf16[8,512], index: 0, kind: input, shape index: {}]
  %s1 = inlined_call_operand.vmem [shape: bf16[512,128], index: 1, kind: input, shape index: {}]
  %s2 = inlined_call_operand.vmem [shape: f32[8,128], index: 2, kind: output, shape index: {}]
  %s3 = sld [smem:[#allocation0]]
  $region18: #{res_block_forward.11} parent=0
    _
  %s5 = ssub.s32 1, %s3
  %s6 = scalar_select 0, %s5, %s3
  // Predicated region
  $region2: #{res_block_forward.11} parent=0 // pred_check
    _
  $region3: #{res_block_forward.11} parent=0 // pred_check_branch
    %8 = sbr.rel (0) target = $region5
  $region4: #{res_block_forward.11} parent=0 // pred_region
    _
  $region5: #{res_block_forward.11} parent=0 // pred_fallthru
    _
  // Predicated region
  $region6: #{res_block_forward.11} parent=0 // pred_check
    _
  $region7: #{res_block_forward.11} parent=0 // pred_check_branch
    %10 = sbr.rel (0) target = $region9
  $region8: #{res_block_forward.11} parent=0 // pred_region
    _
  $region9: #{res_block_forward.11} parent=0 // pred_fallthru
    _
  %v12 = vld [vmem:[%s0] sm:$0xff]
  %v13 = vld [vmem:[%s0 + $0x8] sm:$0xff]
  %v14 = vld [vmem:[%s1] sm:$0xf]
  %v15 = vld [vmem:[%s1 + $0x4] sm:$0xf]
  %v16 = vld [vmem:[%s1 + $0x8] sm:$0xf]
  %v17 = vld [vmem:[%s1 + $0xc] sm:$0xf]
  %v18 = vld [vmem:[%s1 + $0x10] sm:$0xf]
  %v19 = vld [vmem:[%s1 + $0x14] sm:$0xf]
  %v20 = vld [vmem:[%s1 + $0x18] sm:$0xf]
  %v21 = vld [vmem:[%s1 + $0x1c] sm:$0xf]
  %v22 = vld [vmem:[%s1 + $0x20] sm:$0xf]
  %v23 = vld [vmem:[%s1 + $0x24] sm:$0xf]
  %v24 = vld [vmem:[%s1 + $0x28] sm:$0xf]
  %v25 = vld [vmem:[%s1 + $0x2c] sm:$0xf]
  %v26 = vld [vmem:[%s1 + $0x30] sm:$0xf]
  %v27 = vld [vmem:[%s1 + $0x34] sm:$0xf]
  %v28 = vld [vmem:[%s1 + $0x38] sm:$0xf]
  %v29 = vld [vmem:[%s1 + $0x3c] sm:$0xf]
  %v30 = vld [vmem:[%s1 + $0x40] sm:$0xf]
  %v31 = vld [vmem:[%s1 + $0x44] sm:$0xf]
  %v32 = vld [vmem:[%s1 + $0x48] sm:$0xf]
  %v33 = vld [vmem:[%s1 + $0x4c] sm:$0xf]
  %v34 = vld [vmem:[%s1 + $0x50] sm:$0xf]
  %v35 = vld [vmem:[%s1 + $0x54] sm:$0xf]
  %v36 = vld [vmem:[%s1 + $0x58] sm:$0xf]
  %v37 = vld [vmem:[%s1 + $0x5c] sm:$0xf]
  %v38 = vld [vmem:[%s1 + $0x60] sm:$0xf]
  %v39 = vld [vmem:[%s1 + $0x64] sm:$0xf]
  %v40 = vld [vmem:[%s1 + $0x68] sm:$0xf]
  %v41 = vld [vmem:[%s1 + $0x6c] sm:$0xf]
  %v42 = vld [vmem:[%s1 + $0x70] sm:$0xf]
  %v43 = vld [vmem:[%s1 + $0x74] sm:$0xf]
  %v44 = vld [vmem:[%s1 + $0x78] sm:$0xf]
  %v45 = vld [vmem:[%s1 + $0x7c] sm:$0xf]
  %v46 = vld [vmem:[%s1 + $0x80] sm:$0xf]
  %v47 = vld [vmem:[%s1 + $0x84] sm:$0xf]
  %v48 = vld [vmem:[%s1 + $0x88] sm:$0xf]
  %v49 = vld [vmem:[%s1 + $0x8c] sm:$0xf]
  %v50 = vld [vmem:[%s1 + $0x90] sm:$0xf]
  %v51 = vld [vmem:[%s1 + $0x94] sm:$0xf]
  %v52 = vld [vmem:[%s1 + $0x98] sm:$0xf]
  %v53 = vld [vmem:[%s1 + $0x9c] sm:$0xf]
  %v54 = vld [vmem:[%s1 + $0xa0] sm:$0xf]
  %v55 = vld [vmem:[%s1 + $0xa4] sm:$0xf]
  %v56 = vld [vmem:[%s1 + $0xa8] sm:$0xf]
  %v57 = vld [vmem:[%s1 + $0xac] sm:$0xf]
  %v58 = vld [vmem:[%s1 + $0xb0] sm:$0xf]
  %v59 = vld [vmem:[%s1 + $0xb4] sm:$0xf]
  %v60 = vld [vmem:[%s1 + $0xb8] sm:$0xf]
  %v61 = vld [vmem:[%s1 + $0xbc] sm:$0xf]
  %v62 = vld [vmem:[%s1 + $0xc0] sm:$0xf]
  %v63 = vld [vmem:[%s1 + $0xc4] sm:$0xf]
  %v64 = vld [vmem:[%s1 + $0xc8] sm:$0xf]
  %v65 = vld [vmem:[%s1 + $0xcc] sm:$0xf]
  %v66 = vld [vmem:[%s1 + $0xd0] sm:$0xf]
  %v67 = vld [vmem:[%s1 + $0xd4] sm:$0xf]
  %v68 = vld [vmem:[%s1 + $0xd8] sm:$0xf]
  %v69 = vld [vmem:[%s1 + $0xdc] sm:$0xf]
  %v70 = vld [vmem:[%s1 + $0xe0] sm:$0xf]
  %v71 = vld [vmem:[%s1 + $0xe4] sm:$0xf]
  %v72 = vld [vmem:[%s1 + $0xe8] sm:$0xf]
  %v73 = vld [vmem:[%s1 + $0xec] sm:$0xf]
  %v74 = vld [vmem:[%s1 + $0xf0] sm:$0xf]
  %v75 = vld [vmem:[%s1 + $0xf4] sm:$0xf]
  %v76 = vld [vmem:[%s1 + $0xf8] sm:$0xf]
  %v77 = vld [vmem:[%s1 + $0xfc] sm:$0xf]
  %v80 = vunpack.c.l.b16 %v12
  %v81 = vunpack.c.h.b16 %v12
  %v82 = vunpack.c.l.b16 %v13
  %v83 = vunpack.c.h.b16 %v13
  %v84 = vpack.c.b16 %v80, %v80
  %v85 = vpack.c.b16 %v81, %v81
  %v86 = vpack.c.b16 %v82, %v82
  %v87 = vpack.c.b16 %v83, %v83
  %v156 = vunpack.c.l.b16 %v14
  %v157 = vunpack.c.l.b16 %v15
  %v158 = vunpack.c.l.b16 %v16
  %v159 = vunpack.c.l.b16 %v17
  %v160 = vunpack.c.l.b16 %v18
  %v161 = vunpack.c.l.b16 %v19
  %v162 = vunpack.c.l.b16 %v20
  %v163 = vunpack.c.l.b16 %v21
  %v164 = vunpack.c.l.b16 %v22
  %v165 = vunpack.c.l.b16 %v23
  %v166 = vunpack.c.l.b16 %v24
  %v167 = vunpack.c.l.b16 %v25
  %v168 = vunpack.c.l.b16 %v26
  %v169 = vunpack.c.l.b16 %v27
  %v170 = vunpack.c.l.b16 %v28
  %v171 = vunpack.c.l.b16 %v29
  %v172 = vunpack.c.l.b16 %v30
  %v173 = vunpack.c.l.b16 %v31
  %v174 = vunpack.c.l.b16 %v32
  %v175 = vunpack.c.l.b16 %v33
  %v176 = vunpack.c.l.b16 %v34
  %v177 = vunpack.c.l.b16 %v35
  %v178 = vunpack.c.l.b16 %v36
  %v179 = vunpack.c.l.b16 %v37
  %v180 = vunpack.c.l.b16 %v38
  %v181 = vunpack.c.l.b16 %v39
  %v182 = vunpack.c.l.b16 %v40
  %v183 = vunpack.c.l.b16 %v41
  %v184 = vunpack.c.l.b16 %v42
  %v185 = vunpack.c.l.b16 %v43
  %v186 = vunpack.c.l.b16 %v44
  %v187 = vunpack.c.l.b16 %v45
  %v188 = vunpack.c.l.b16 %v46
  %v189 = vunpack.c.l.b16 %v47
  %v190 = vunpack.c.l.b16 %v48
  %v191 = vunpack.c.l.b16 %v49
  %v192 = vunpack.c.l.b16 %v50
  %v193 = vunpack.c.l.b16 %v51
  %v194 = vunpack.c.l.b16 %v52
  %v195 = vunpack.c.l.b16 %v53
  %v196 = vunpack.c.l.b16 %v54
  %v197 = vunpack.c.l.b16 %v55
  %v198 = vunpack.c.l.b16 %v56
  %v199 = vunpack.c.l.b16 %v57
  %v200 = vunpack.c.l.b16 %v58
  %v201 = vunpack.c.l.b16 %v59
  %v202 = vunpack.c.l.b16 %v60
  %v203 = vunpack.c.l.b16 %v61
  %v204 = vunpack.c.l.b16 %v62
  %v205 = vunpack.c.l.b16 %v63
  %v206 = vunpack.c.l.b16 %v64
  %v207 = vunpack.c.l.b16 %v65
  %v208 = vunpack.c.l.b16 %v66
  %v209 = vunpack.c.l.b16 %v67
  %v210 = vunpack.c.l.b16 %v68
  %v211 = vunpack.c.l.b16 %v69
  %v212 = vunpack.c.l.b16 %v70
  %v213 = vunpack.c.l.b16 %v71
  %v214 = vunpack.c.l.b16 %v72
  %v215 = vunpack.c.l.b16 %v73
  %v216 = vunpack.c.l.b16 %v74
  %v217 = vunpack.c.l.b16 %v75
  %v218 = vunpack.c.l.b16 %v76
  %v219 = vunpack.c.l.b16 %v77
  %v220 = vpack.c.b16 %v157, %v156
  %v221 = vpack.c.b16 %v159, %v158
  %v222 = vpack.c.b16 %v161, %v160
  %v223 = vpack.c.b16 %v163, %v162
  %v224 = vpack.c.b16 %v165, %v164
  %v225 = vpack.c.b16 %v167, %v166
  %v226 = vpack.c.b16 %v169, %v168
  %v227 = vpack.c.b16 %v171, %v170
  %v228 = vpack.c.b16 %v173, %v172
  %v229 = vpack.c.b16 %v175, %v174
  %v230 = vpack.c.b16 %v177, %v176
  %v231 = vpack.c.b16 %v179, %v178
  %v232 = vpack.c.b16 %v181, %v180
  %v233 = vpack.c.b16 %v183, %v182
  %v234 = vpack.c.b16 %v185, %v184
  %v235 = vpack.c.b16 %v187, %v186
  %v236 = vpack.c.b16 %v189, %v188
  %v237 = vpack.c.b16 %v191, %v190
  %v238 = vpack.c.b16 %v193, %v192
  %v239 = vpack.c.b16 %v195, %v194
  %v240 = vpack.c.b16 %v197, %v196
  %v241 = vpack.c.b16 %v199, %v198
  %v242 = vpack.c.b16 %v201, %v200
  %v243 = vpack.c.b16 %v203, %v202
  %v244 = vpack.c.b16 %v205, %v204
  %v245 = vpack.c.b16 %v207, %v206
  %v246 = vpack.c.b16 %v209, %v208
  %v247 = vpack.c.b16 %v211, %v210
  %v248 = vpack.c.b16 %v213, %v212
  %v249 = vpack.c.b16 %v215, %v214
  %v250 = vpack.c.b16 %v217, %v216
  %v251 = vpack.c.b16 %v219, %v218
  %284 = vmatprep.subr.bf16.mxu0 0
  %285 = vmatpush1.bf16.msra.mxu0 %v227
  %286 = vmatprep.subr.bf16.mxu0 0
  %287 = vmatpush1.bf16.msra.mxu0 %v226
  %288 = vmatprep.subr.bf16.mxu0 0
  %289 = vmatpush1.bf16.msra.mxu0 %v225
  %290 = vmatprep.subr.bf16.mxu0 0
  %291 = vmatpush1.bf16.msra.mxu0 %v224
  %292 = vmatprep.subr.bf16.mxu0 0
  %293 = vmatpush1.bf16.msra.mxu0 %v223
  %294 = vmatprep.subr.bf16.mxu0 0
  %295 = vmatpush1.bf16.msra.mxu0 %v222
  %296 = vmatprep.subr.bf16.mxu0 0
  %297 = vmatpush1.bf16.msra.mxu0 %v221
  %298 = vmatprep.subr.bf16.mxu0 0
  %299 = vmatpush1.bf16.msra.mxu0 %v220
  %300 = vmatprep.subr.bf16.mxu0 0
  %301 = vmatpush2.bf16.msra.mxu0 %v235
  %302 = vmatprep.subr.bf16.mxu0 0
  %303 = vmatpush2.bf16.msra.mxu0 %v234
  %304 = vmatprep.subr.bf16.mxu0 0
  %305 = vmatpush2.bf16.msra.mxu0 %v233
  %306 = vmatprep.subr.bf16.mxu0 0
  %307 = vmatpush2.bf16.msra.mxu0 %v232
  %308 = vmatprep.subr.bf16.mxu0 0
  %309 = vmatpush2.bf16.msra.mxu0 %v231
  %310 = vmatprep.subr.bf16.mxu0 0
  %311 = vmatpush2.bf16.msra.mxu0 %v230
  %312 = vmatprep.subr.bf16.mxu0 0
  %313 = vmatpush2.bf16.msra.mxu0 %v229
  %314 = vmatprep.subr.bf16.mxu0 0
  %315 = vmatpush2.bf16.msra.mxu0 %v228
  %316 = vmatprep.mubr.bf16.mxu0 %v85
  %317 = vmatmul.mubr.bf16.gmra.mxu0 %v84
  %v318 = vpop.f32.mrf.mxu0
  %v319 = vadd.f32 0.0, %v318
  %v320 = vpop.f32.mrf.mxu0
  %v321 = vpop.f32.mrf.mxu0
  %v322 = vpop.f32.mrf.mxu0
  %323 = vdwg.mxu0
  %324 = vmatprep.subr.bf16.mxu0 0
  %325 = vmatpush1.bf16.msra.mxu0 %v243
  %326 = vmatprep.subr.bf16.mxu0 0
  %327 = vmatpush1.bf16.msra.mxu0 %v242
  %328 = vmatprep.subr.bf16.mxu0 0
  %329 = vmatpush1.bf16.msra.mxu0 %v241
  %330 = vmatprep.subr.bf16.mxu0 0
  %331 = vmatpush1.bf16.msra.mxu0 %v240
  %332 = vmatprep.subr.bf16.mxu0 0
  %333 = vmatpush1.bf16.msra.mxu0 %v239
  %334 = vmatprep.subr.bf16.mxu0 0
  %335 = vmatpush1.bf16.msra.mxu0 %v238
  %336 = vmatprep.subr.bf16.mxu0 0
  %337 = vmatpush1.bf16.msra.mxu0 %v237
  %338 = vmatprep.subr.bf16.mxu0 0
  %339 = vmatpush1.bf16.msra.mxu0 %v236
  %340 = vmatprep.subr.bf16.mxu0 0
  %341 = vmatpush2.bf16.msra.mxu0 %v251
  %342 = vmatprep.subr.bf16.mxu0 0
  %343 = vmatpush2.bf16.msra.mxu0 %v250
  %344 = vmatprep.subr.bf16.mxu0 0
  %345 = vmatpush2.bf16.msra.mxu0 %v249
  %346 = vmatprep.subr.bf16.mxu0 0
  %347 = vmatpush2.bf16.msra.mxu0 %v248
  %348 = vmatprep.subr.bf16.mxu0 0
  %349 = vmatpush2.bf16.msra.mxu0 %v247
  %350 = vmatprep.subr.bf16.mxu0 0
  %351 = vmatpush2.bf16.msra.mxu0 %v246
  %352 = vmatprep.subr.bf16.mxu0 0
  %353 = vmatpush2.bf16.msra.mxu0 %v245
  %354 = vmatprep.subr.bf16.mxu0 0
  %355 = vmatpush2.bf16.msra.mxu0 %v244
  %356 = vmatprep.mubr.bf16.mxu0 %v87
  %357 = vmatmul.mubr.bf16.gmra.mxu0 %v86
  %v358 = vpop.f32.mrf.mxu0
  %v359 = vadd.f32 %v319, %v358
  %v360 = vpop.f32.mrf.mxu0
  %v361 = vpop.f32.mrf.mxu0
  %v362 = vpop.f32.mrf.mxu0
  %363 = vdwg.mxu0
  %vm364 = vcmp.ge.f32.partialorder %v359, 0.0
  %v365 = vmul.f32 %v359, 0.01
  %v366 = vsel %vm364, %v359, %v365
  %367 = vst [vmem:[%s2] sm:$0xff] %v366
  // Predicated region
  $region10: #{res_block_forward.11} parent=0 // pred_check
    _
  $region11: #{res_block_forward.11} parent=0 // pred_check_branch
    %369 = sbr.rel (0) target = $region13
  $region12: #{res_block_forward.11} parent=0 // pred_region
    _
  $region13: #{res_block_forward.11} parent=0 // pred_fallthru
    _
  // Predicated region
  $region14: #{res_block_forward.11} parent=0 // pred_check
    _
  $region15: #{res_block_forward.11} parent=0 // pred_check_branch
    %371 = sbr.rel (0) target = $region17
  $region16: #{res_block_forward.11} parent=0 // pred_region
    _
  $region17: #{res_block_forward.11} parent=0 // pred_fallthru
    _

// kernel: res_block_forward.12
$region0: #{res_block_forward.12}
  #allocation0 [shape = 'u32[]', space=smem, size = 0x4, offset = 0x4, fixed_abs, tag = 'smem constant byte address 0x4 - core index']
  #allocation1 [shape = 'u32[144,128]{1,0:T(1,128)}', space=vmem, size = 0x12000, scoped, tag = 'internal scratch']
  %s0 = inlined_call_operand.vmem [shape: bf16[4,256], index: 0, kind: input, shape index: {}]
  %s1 = inlined_call_operand.vmem [shape: bf16[256,512], index: 1, kind: input, shape index: {}]
  %s2 = inlined_call_operand.vmem [shape: f32[4,512], index: 2, kind: output, shape index: {}]
  %s3 = sld [smem:[#allocation0]]
  $region79: #{res_block_forward.12} parent=0
    _
  %s5 = ssub.s32 1, %s3
  %s6 = scalar_select 0, %s5, %s3
  $region1: #{res_block_forward.12} parent=0
    #allocation2 [shape = 'u8[262144]{0}', space=vmem, size = 0x40000, scoped, tag = 'input window, operand 1']
    loop: start=0, step=1, limit=4
    $region2: #{res_block_forward.12} parent=1 // loop_pre_header
      _
    $region3: #{res_block_forward.12} parent=1 // loop_header
      %s8 = sphi 0, %s12
      %p9 = scmp.ge.s32.totalorder %s8, 4
      %s16 = sphi 0, %s16
      %s18 = sphi 0, %s16
      %s19 = sphi 0, %s18
      %s33 = sphi 0, %s19
      %s39 = sphi 0, %s41
      %s42 = sphi 0, %s39
      %s43 = sphi 0, %s42
      %s59 = sphi 0, %s43
      %s65 = sphi 0, %s67
      %s68 = sphi 0, %s65
      %s69 = sphi 0, %s68
      %s85 = sphi 0, %s69
    $region4: #{res_block_forward.12} parent=1 // loop_header_branch
      %11 = sbr.rel (%p9) target = $region8
    $region5: #{res_block_forward.12} parent=1 // loop_body
      %s13 = ssub.s32 %s8, 1
      %s14 = ssub.s32 %s8, 2
      %s15 = sadd.s32 %s8, 1
      %s17 = sadd.s32 %s16, 1
      %p20 = scmp.eq.s32.totalorder %s8, 1
      %p21 = scmp.ne.s32.totalorder %s16, %s18
      %p22 = scmp.eq.s32.totalorder %s8, 0
      %p23 = por %p21, %p22
      %p24 = scmp.ne.s32.totalorder %s16, %s18
      %p25 = scmp.eq.s32.totalorder %s13, 1
      %p26 = por %p24, %p25
      %p27 = scmp.ne.s32.totalorder %s18, %s19
      %p28 = scmp.eq.s32.totalorder %s13, 0
      %p29 = por %p27, %p28
      %p30 = scmp.ne.s32.totalorder %s18, %s19
      %p31 = scmp.eq.s32.totalorder %s14, 1
      %p32 = por %p30, %p31
      %p34 = scmp.ne.s32.totalorder %s19, %s33
      %p35 = scmp.eq.s32.totalorder %s14, 0
      %p36 = por %p34, %p35
      %s37 = ssub.s32 %s8, %s15
      %p38 = scmp.eq.s32.totalorder %s37, 0
      %s40 = sadd.s32 %s39, 1
      %s41 = scalar_select %p38, %s39, %s40
      %p44 = pneg %p38
      %p45 = scmp.eq.s32.totalorder %s8, 1
      %p46 = por %p44, %p45
      %p47 = scmp.ne.s32.totalorder %s39, %s42
      %p48 = scmp.eq.s32.totalorder %s8, 0
      %p49 = por %p47, %p48
      %p50 = scmp.ne.s32.totalorder %s39, %s42
      %p51 = scmp.eq.s32.totalorder %s13, 1
      %p52 = por %p50, %p51
      %p53 = scmp.ne.s32.totalorder %s42, %s43
      %p54 = scmp.eq.s32.totalorder %s13, 0
      %p55 = por %p53, %p54
      %p56 = scmp.ne.s32.totalorder %s42, %s43
      %p57 = scmp.eq.s32.totalorder %s14, 1
      %p58 = por %p56, %p57
      %p60 = scmp.ne.s32.totalorder %s43, %s59
      %p61 = scmp.eq.s32.totalorder %s14, 0
      %p62 = por %p60, %p61
      %s63 = ssub.s32 %s8, %s15
      %p64 = scmp.eq.s32.totalorder %s63, 0
      %s66 = sadd.s32 %s65, 1
      %s67 = scalar_select %p64, %s65, %s66
      %p70 = pneg %p64
      %p71 = scmp.eq.s32.totalorder %s8, 1
      %p72 = por %p70, %p71
      %p73 = scmp.ne.s32.totalorder %s65, %s68
      %p74 = scmp.eq.s32.totalorder %s8, 0
      %p75 = por %p73, %p74
      %p76 = scmp.ne.s32.totalorder %s65, %s68
      %p77 = scmp.eq.s32.totalorder %s13, 1
      %p78 = por %p76, %p77
      %p79 = scmp.ne.s32.totalorder %s68, %s69
      %p80 = scmp.eq.s32.totalorder %s13, 0
      %p81 = por %p79, %p80
      %p82 = scmp.ne.s32.totalorder %s68, %s69
      %p83 = scmp.eq.s32.totalorder %s14, 1
      %p84 = por %p82, %p83
      %p86 = scmp.ne.s32.totalorder %s69, %s85
      %p87 = scmp.eq.s32.totalorder %s14, 0
      %p88 = por %p86, %p87
      %p89 = scmp.le.s32.totalorder 1, %s8
      %p90 = scmp.lt.s32.totalorder %s8, 3
      %p91 = pnand %p89, %p90
      %p92 = pneg %p91
      // Predicated region
      $region9: #{res_block_forward.12} parent=5 // pred_check
        _
      $region10: #{res_block_forward.12} parent=5 // pred_check_branch
        %94 = sbr.rel (%p91) target = $region12
      $region11: #{res_block_forward.12} parent=5 // pred_region
        %s95 = ssub.s32 %s8, 1
        // Predicated region
        $region13: #{res_block_forward.12} parent=11 // pred_check
          %p96 = pneg %p29
        $region14: #{res_block_forward.12} parent=11 // pred_check_branch
          %98 = sbr.rel (%p96) target = $region16
        $region15: #{res_block_forward.12} parent=11 // pred_region
          _
        $region16: #{res_block_forward.12} parent=11 // pred_fallthru
          _
      $region12: #{res_block_forward.12} parent=5 // pred_fallthru
        _
      %p99 = scmp.lt.s32.totalorder %s8, 2
      // Predicated region
      $region17: #{res_block_forward.12} parent=5 // pred_check
        %p100 = pneg %p99
      $region18: #{res_block_forward.12} parent=5 // pred_check_branch
        %102 = sbr.rel (%p100) target = $region20
      $region19: #{res_block_forward.12} parent=5 // pred_region
        // Predicated region
        $region21: #{res_block_forward.12} parent=19 // pred_check
          %p103 = pneg %p49
        $region22: #{res_block_forward.12} parent=19 // pred_check_branch
          %105 = sbr.rel (%p103) target = $region24
        $region23: #{res_block_forward.12} parent=19 // pred_region
          %s106 = sand.u32 %s39, 1
          %s107 = sand.u32 %s39, 1
          %s108 = smul.addr %s107, 256
          %s109 = scalar_lea.vmem [#allocation2], %s108
          %s110 = smul.u32 2, %s8
          %s111 = smul.addr %s110, 4
          %s112 = scalar_lea.vmem %s1, %s111
          // Predicated region
          $region25: #{res_block_forward.12} parent=23 // pred_check
            _
          $region26: #{res_block_forward.12} parent=23 // pred_check_branch
            %114 = sbr.rel (0) target = $region28
          $region27: #{res_block_forward.12} parent=23 // pred_region
            // Predicated region
            $region29: #{res_block_forward.12} parent=27 // pred_check
              _
            $region30: #{res_block_forward.12} parent=27 // pred_check_branch
              %116 = sbr.rel (0) target = $region32
            $region31: #{res_block_forward.12} parent=27 // pred_region
              // Predicated region
              $region44: #{res_block_forward.12} parent=31 // pred_check
                _
              $region45: #{res_block_forward.12} parent=31 // pred_check_branch
                %194 = sbr.rel (0) target = $region47
              $region46: #{res_block_forward.12} parent=31 // pred_region
                loop: start=0, step=1, limit=1
                $region48: #{res_block_forward.12} parent=46 // loop_pre_header
                  _
                $region49: #{res_block_forward.12} parent=46 // loop_header
                  %s196 = sphi 0, %s200
                  %p197 = scmp.ge.s32.totalorder %s196, 1
                  %s201 = sphi %s112, %s112
                  %s202 = sphi %s109, %s109
                $region50: #{res_block_forward.12} parent=46 // loop_header_branch
                  %199 = sbr.rel (%p197) target = $region54
                $region51: #{res_block_forward.12} parent=46 // loop_body
                  %v203 = vld [vmem:[%s201] sm:$0xff]
                  %204 = vst [vmem:[%s202] sm:$0xff] %v203
                  %v205 = vld [vmem:[%s201 + $0x10] sm:$0xff]
                  %206 = vst [vmem:[%s202 + $0x8] sm:$0xff] %v205
                  %v207 = vld [vmem:[%s201 + $0x20] sm:$0xff]
                  %208 = vst [vmem:[%s202 + $0x10] sm:$0xff] %v207
                  %v209 = vld [vmem:[%s201 + $0x30] sm:$0xff]
                  %210 = vst [vmem:[%s202 + $0x18] sm:$0xff] %v209
                  %v211 = vld [vmem:[%s201 + $0x40] sm:$0xff]
                  %212 = vst [vmem:[%s202 + $0x20] sm:$0xff] %v211
                  %v213 = vld [vmem:[%s201 + $0x50] sm:$0xff]
                  %214 = vst [vmem:[%s202 + $0x28] sm:$0xff] %v213
                  %v215 = vld [vmem:[%s201 + $0x60] sm:$0xff]
                  %216 = vst [vmem:[%s202 + $0x30] sm:$0xff] %v215
                  %v217 = vld [vmem:[%s201 + $0x70] sm:$0xff]
                  %218 = vst [vmem:[%s202 + $0x38] sm:$0xff] %v217
                  %v219 = vld [vmem:[%s201 + $0x80] sm:$0xff]
                  %220 = vst [vmem:[%s202 + $0x40] sm:$0xff] %v219
                  %v221 = vld [vmem:[%s201 + $0x90] sm:$0xff]
                  %222 = vst [vmem:[%s202 + $0x48] sm:$0xff] %v221
                  %v223 = vld [vmem:[%s201 + $0xa0] sm:$0xff]
                  %224 = vst [vmem:[%s202 + $0x50] sm:$0xff] %v223
                  %v225 = vld [vmem:[%s201 + $0xb0] sm:$0xff]
                  %226 = vst [vmem:[%s202 + $0x58] sm:$0xff] %v225
                  %v227 = vld [vmem:[%s201 + $0xc0] sm:$0xff]
                  %228 = vst [vmem:[%s202 + $0x60] sm:$0xff] %v227
                  %v229 = vld [vmem:[%s201 + $0xd0] sm:$0xff]
                  %230 = vst [vmem:[%s202 + $0x68] sm:$0xff] %v229
                  %v231 = vld [vmem:[%s201 + $0xe0] sm:$0xff]
                  %232 = vst [vmem:[%s202 + $0x70] sm:$0xff] %v231
                  %v233 = vld [vmem:[%s201 + $0xf0] sm:$0xff]
                  %234 = vst [vmem:[%s202 + $0x78] sm:$0xff] %v233
                  %v235 = vld [vmem:[%s201 + $0x100] sm:$0xff]
                  %236 = vst [vmem:[%s202 + $0x80] sm:$0xff] %v235
                  %v237 = vld [vmem:[%s201 + $0x110] sm:$0xff]
                  %238 = vst [vmem:[%s202 + $0x88] sm:$0xff] %v237
                  %v239 = vld [vmem:[%s201 + $0x120] sm:$0xff]
                  %240 = vst [vmem:[%s202 + $0x90] sm:$0xff] %v239
                  %v241 = vld [vmem:[%s201 + $0x130] sm:$0xff]
                  %242 = vst [vmem:[%s202 + $0x98] sm:$0xff] %v241
                  %v243 = vld [vmem:[%s201 + $0x140] sm:$0xff]
                  %244 = vst [vmem:[%s202 + $0xa0] sm:$0xff] %v243
                  %v245 = vld [vmem:[%s201 + $0x150] sm:$0xff]
                  %246 = vst [vmem:[%s202 + $0xa8] sm:$0xff] %v245
                  %v247 = vld [vmem:[%s201 + $0x160] sm:$0xff]
                  %248 = vst [vmem:[%s202 + $0xb0] sm:$0xff] %v247
                  %v249 = vld [vmem:[%s201 + $0x170] sm:$0xff]
                  %250 = vst [vmem:[%s202 + $0xb8] sm:$0xff] %v249
                  %v251 = vld [vmem:[%s201 + $0x180] sm:$0xff]
                  %252 = vst [vmem:[%s202 + $0xc0] sm:$0xff] %v251
                  %v253 = vld [vmem:[%s201 + $0x190] sm:$0xff]
                  %254 = vst [vmem:[%s202 + $0xc8] sm:$0xff] %v253
                  %v255 = vld [vmem:[%s201 + $0x1a0] sm:$0xff]
                  %256 = vst [vmem:[%s202 + $0xd0] sm:$0xff] %v255
                  %v257 = vld [vmem:[%s201 + $0x1b0] sm:$0xff]
                  %258 = vst [vmem:[%s202 + $0xd8] sm:$0xff] %v257
                  %v259 = vld [vmem:[%s201 + $0x1c0] sm:$0xff]
                  %260 = vst [vmem:[%s202 + $0xe0] sm:$0xff] %v259
                  %v261 = vld [vmem:[%s201 + $0x1d0] sm:$0xff]
                  %262 = vst [vmem:[%s202 + $0xe8] sm:$0xff] %v261
                  %v263 = vld [vmem:[%s201 + $0x1e0] sm:$0xff]
                  %264 = vst [vmem:[%s202 + $0xf0] sm:$0xff] %v263
                  %v265 = vld [vmem:[%s201 + $0x1f0] sm:$0xff]
                  %266 = vst [vmem:[%s202 + $0xf8] sm:$0xff] %v265
                $region52: #{res_block_forward.12} parent=46 // loop_footer
                  %s200 = sadd.s32 1, %s196
                $region53: #{res_block_forward.12} parent=46 // loop_footer_branch
                  %195 = sbr.rel target = $region49
                $region54: #{res_block_forward.12} parent=46 // loop_exit
                  _
              $region47: #{res_block_forward.12} parent=31 // pred_fallthru
                _
              // Predicated region
              $region55: #{res_block_forward.12} parent=31 // pred_check
                _
              $region56: #{res_block_forward.12} parent=31 // pred_check_branch
                %268 = sbr.rel target = $region58
              $region57: #{res_block_forward.12} parent=31 // pred_region
                _
              $region58: #{res_block_forward.12} parent=31 // pred_fallthru
                _
            $region32: #{res_block_forward.12} parent=27 // pred_fallthru
              _
            // Predicated region
            $region33: #{res_block_forward.12} parent=27 // pred_check
              _
            $region34: #{res_block_forward.12} parent=27 // pred_check_branch
              %118 = sbr.rel target = $region36
            $region35: #{res_block_forward.12} parent=27 // pred_region
              %s120 = ssub.s32 256, 1
              loop: start=0, step=1, limit=1
              $region37: #{res_block_forward.12} parent=35 // loop_pre_header
                _
              $region38: #{res_block_forward.12} parent=35 // loop_header
                %s122 = sphi 0, %s126
                %p123 = scmp.ge.s32.totalorder %s122, 1
                %s127 = sphi %s112, %s112
                %s128 = sphi %s109, %s109
              $region39: #{res_block_forward.12} parent=35 // loop_header_branch
                %125 = sbr.rel (%p123) target = $region43
              $region40: #{res_block_forward.12} parent=35 // loop_body
                %v129 = vld [vmem:[%s127] sm:%s120]
                %130 = vst [vmem:[%s128] sm:%s120] %v129
                %v131 = vld [vmem:[%s127 + $0x10] sm:%s120]
                %132 = vst [vmem:[%s128 + $0x8] sm:%s120] %v131
                %v133 = vld [vmem:[%s127 + $0x20] sm:%s120]
                %134 = vst [vmem:[%s128 + $0x10] sm:%s120] %v133
                %v135 = vld [vmem:[%s127 + $0x30] sm:%s120]
                %136 = vst [vmem:[%s128 + $0x18] sm:%s120] %v135
                %v137 = vld [vmem:[%s127 + $0x40] sm:%s120]
                %138 = vst [vmem:[%s128 + $0x20] sm:%s120] %v137
                %v139 = vld [vmem:[%s127 + $0x50] sm:%s120]
                %140 = vst [vmem:[%s128 + $0x28] sm:%s120] %v139
                %v141 = vld [vmem:[%s127 + $0x60] sm:%s120]
                %142 = vst [vmem:[%s128 + $0x30] sm:%s120] %v141
                %v143 = vld [vmem:[%s127 + $0x70] sm:%s120]
                %144 = vst [vmem:[%s128 + $0x38] sm:%s120] %v143
                %v145 = vld [vmem:[%s127 + $0x80] sm:%s120]
                %146 = vst [vmem:[%s128 + $0x40] sm:%s120] %v145
                %v147 = vld [vmem:[%s127 + $0x90] sm:%s120]
                %148 = vst [vmem:[%s128 + $0x48] sm:%s120] %v147
                %v149 = vld [vmem:[%s127 + $0xa0] sm:%s120]
                %150 = vst [vmem:[%s128 + $0x50] sm:%s120] %v149
                %v151 = vld [vmem:[%s127 + $0xb0] sm:%s120]
                %152 = vst [vmem:[%s128 + $0x58] sm:%s120] %v151
                %v153 = vld [vmem:[%s127 + $0xc0] sm:%s120]
                %154 = vst [vmem:[%s128 + $0x60] sm:%s120] %v153
                %v155 = vld [vmem:[%s127 + $0xd0] sm:%s120]
                %156 = vst [vmem:[%s128 + $0x68] sm:%s120] %v155
                %v157 = vld [vmem:[%s127 + $0xe0] sm:%s120]
                %158 = vst [vmem:[%s128 + $0x70] sm:%s120] %v157
                %v159 = vld [vmem:[%s127 + $0xf0] sm:%s120]
                %160 = vst [vmem:[%s128 + $0x78] sm:%s120] %v159
                %v161 = vld [vmem:[%s127 + $0x100] sm:%s120]
                %162 = vst [vmem:[%s128 + $0x80] sm:%s120] %v161
                %v163 = vld [vmem:[%s127 + $0x110] sm:%s120]
                %164 = vst [vmem:[%s128 + $0x88] sm:%s120] %v163
                %v165 = vld [vmem:[%s127 + $0x120] sm:%s120]
                %166 = vst [vmem:[%s128 + $0x90] sm:%s120] %v165
                %v167 = vld [vmem:[%s127 + $0x130] sm:%s120]
                %168 = vst [vmem:[%s128 + $0x98] sm:%s120] %v167
                %v169 = vld [vmem:[%s127 + $0x140] sm:%s120]
                %170 = vst [vmem:[%s128 + $0xa0] sm:%s120] %v169
                %v171 = vld [vmem:[%s127 + $0x150] sm:%s120]
                %172 = vst [vmem:[%s128 + $0xa8] sm:%s120] %v171
                %v173 = vld [vmem:[%s127 + $0x160] sm:%s120]
                %174 = vst [vmem:[%s128 + $0xb0] sm:%s120] %v173
                %v175 = vld [vmem:[%s127 + $0x170] sm:%s120]
                %176 = vst [vmem:[%s128 + $0xb8] sm:%s120] %v175
                %v177 = vld [vmem:[%s127 + $0x180] sm:%s120]
                %178 = vst [vmem:[%s128 + $0xc0] sm:%s120] %v177
                %v179 = vld [vmem:[%s127 + $0x190] sm:%s120]
                %180 = vst [vmem:[%s128 + $0xc8] sm:%s120] %v179
                %v181 = vld [vmem:[%s127 + $0x1a0] sm:%s120]
                %182 = vst [vmem:[%s128 + $0xd0] sm:%s120] %v181
                %v183 = vld [vmem:[%s127 + $0x1b0] sm:%s120]
                %184 = vst [vmem:[%s128 + $0xd8] sm:%s120] %v183
                %v185 = vld [vmem:[%s127 + $0x1c0] sm:%s120]
                %186 = vst [vmem:[%s128 + $0xe0] sm:%s120] %v185
                %v187 = vld [vmem:[%s127 + $0x1d0] sm:%s120]
                %188 = vst [vmem:[%s128 + $0xe8] sm:%s120] %v187
                %v189 = vld [vmem:[%s127 + $0x1e0] sm:%s120]
                %190 = vst [vmem:[%s128 + $0xf0] sm:%s120] %v189
                %v191 = vld [vmem:[%s127 + $0x1f0] sm:%s120]
                %192 = vst [vmem:[%s128 + $0xf8] sm:%s120] %v191
              $region41: #{res_block_forward.12} parent=35 // loop_footer
                %s126 = sadd.s32 1, %s122
              $region42: #{res_block_forward.12} parent=35 // loop_footer_branch
                %121 = sbr.rel target = $region38
              $region43: #{res_block_forward.12} parent=35 // loop_exit
                _
            $region36: #{res_block_forward.12} parent=27 // pred_fallthru
              _
          $region28: #{res_block_forward.12} parent=23 // pred_fallthru
            _
          %269 = vnop
        $region24: #{res_block_forward.12} parent=19 // pred_fallthru
          _
      $region20: #{res_block_forward.12} parent=5 // pred_fallthru
        _
      %p270 = scmp.le.s32.totalorder 1, %s8
      %p271 = scmp.lt.s32.totalorder %s8, 3
      %p272 = pnand %p270, %p271
      %p273 = pneg %p272
      // Predicated region
      $region59: #{res_block_forward.12} parent=5 // pred_check
        _
      $region60: #{res_block_forward.12} parent=5 // pred_check_branch
        %275 = sbr.rel (%p272) target = $region62
      $region61: #{res_block_forward.12} parent=5 // pred_region
        %s276 = ssub.s32 %s8, 1
        %s277 = sand.u32 %s42, 1
        %s278 = sand.u32 %s42, 1
        %s279 = smul.addr %s278, 256
        %s280 = scalar_lea.vmem [#allocation2], %s279
        // Predicated region
        $region63: #{res_block_forward.12} parent=61 // pred_check
          %p281 = pneg %p55
        $region64: #{res_block_forward.12} parent=61 // pred_check_branch
          %283 = sbr.rel (%p281) target = $region66
        $region65: #{res_block_forward.12} parent=61 // pred_region
          _
        $region66: #{res_block_forward.12} parent=61 // pred_fallthru
          _
        %p284 = pneg %p29
        %p285 = pneg %p26
        %s286 = sand.u32 %s42, 1
        %s287 = sand.u32 %s42, 1
        %s288 = smul.addr %s287, 256
        %s289 = scalar_lea.vmem [#allocation2], %s288
        %p290 = pneg %p55
        %p291 = pneg %p52
        %p292 = pneg %p81
        %p293 = pneg %p78
        %s294 = smul.u32 2, %s13
        %p295 = scmp.lt.s32.totalorder %s294, 3
        %s296 = scalar_select %p295, %s294, 3
        %s297 = smul.addr %s296, 4
        %s298 = scalar_lea.vmem %s2, %s297
        %s299 = smul.u32 2, %s13
        %s300 = smul.u32 2, %s13
        %p301 = scmp.lt.s32.totalorder %s300, 3
        %s302 = scalar_select %p301, %s300, 3
        %s303 = smul.addr %s302, 4
        %s304 = scalar_lea.vmem %s2, %s303
        %s305 = smul.u32 2, %s13
        %v306 = vld [vmem:[%s0] sm:$0xf]
        %v307 = vld [vmem:[%s280] sm:$0xff]
        %v308 = vld [vmem:[%s280 + $0x8] sm:$0xff]
        %v309 = vld [vmem:[%s280 + $0x10] sm:$0xff]
        %v310 = vld [vmem:[%s280 + $0x18] sm:$0xff]
        %v311 = vld [vmem:[%s280 + $0x20] sm:$0xff]
        %v312 = vld [vmem:[%s280 + $0x28] sm:$0xff]
        %v313 = vld [vmem:[%s280 + $0x30] sm:$0xff]
        %v314 = vld [vmem:[%s280 + $0x38] sm:$0xff]
        %v315 = vld [vmem:[%s280 + $0x40] sm:$0xff]
        %v316 = vld [vmem:[%s280 + $0x48] sm:$0xff]
        %v317 = vld [vmem:[%s280 + $0x50] sm:$0xff]
        %v318 = vld [vmem:[%s280 + $0x58] sm:$0xff]
        %v319 = vld [vmem:[%s280 + $0x60] sm:$0xff]
        %v320 = vld [vmem:[%s280 + $0x68] sm:$0xff]
        %v321 = vld [vmem:[%s280 + $0x70] sm:$0xff]
        %v322 = vld [vmem:[%s280 + $0x78] sm:$0xff]
        %v323 = vld [vmem:[%s280 + $0x80] sm:$0xff]
        %v324 = vld [vmem:[%s280 + $0x88] sm:$0xff]
        %v325 = vld [vmem:[%s280 + $0x90] sm:$0xff]
        %v326 = vld [vmem:[%s280 + $0x98] sm:$0xff]
        %v327 = vld [vmem:[%s280 + $0xa0] sm:$0xff]
        %v328 = vld [vmem:[%s280 + $0xa8] sm:$0xff]
        %v329 = vld [vmem:[%s280 + $0xb0] sm:$0xff]
        %v330 = vld [vmem:[%s280 + $0xb8] sm:$0xff]
        %v331 = vld [vmem:[%s280 + $0xc0] sm:$0xff]
        %v332 = vld [vmem:[%s280 + $0xc8] sm:$0xff]
        %v333 = vld [vmem:[%s280 + $0xd0] sm:$0xff]
        %v334 = vld [vmem:[%s280 + $0xd8] sm:$0xff]
        %v335 = vld [vmem:[%s280 + $0xe0] sm:$0xff]
        %v336 = vld [vmem:[%s280 + $0xe8] sm:$0xff]
        %v337 = vld [vmem:[%s280 + $0xf0] sm:$0xff]
        %v338 = vld [vmem:[%s280 + $0xf8] sm:$0xff]
        %v341 = vunpack.c.l.s4 1983009808
        %v342 = vunpack.c.0.s8 %v341
        %v343 = vlaneseq
        %v344 = vshrl.u32 %v343, 7
        %v345 = vsub.s32 %v342, %v344
        %v346 = vrot.slane %v306, %v345
        %v347 = vcombine.high %v346, %v346
        %v382 = vunpack.c.l.b16 %v307
        %v383 = vunpack.c.h.b16 %v307
        %v384 = vunpack.c.l.b16 %v308
        %v385 = vunpack.c.h.b16 %v308
        %v386 = vunpack.c.l.b16 %v309
        %v387 = vunpack.c.h.b16 %v309
        %v388 = vunpack.c.l.b16 %v310
        %v389 = vunpack.c.h.b16 %v310
        %v390 = vunpack.c.l.b16 %v311
        %v391 = vunpack.c.h.b16 %v311
        %v392 = vunpack.c.l.b16 %v312
        %v393 = vunpack.c.h.b16 %v312
        %v394 = vunpack.c.l.b16 %v313
        %v395 = vunpack.c.h.b16 %v313
        %v396 = vunpack.c.l.b16 %v314
        %v397 = vunpack.c.h.b16 %v314
        %v398 = vunpack.c.l.b16 %v315
        %v399 = vunpack.c.h.b16 %v315
        %v400 = vunpack.c.l.b16 %v316
        %v401 = vunpack.c.h.b16 %v316
        %v402 = vunpack.c.l.b16 %v317
        %v403 = vunpack.c.h.b16 %v317
        %v404 = vunpack.c.l.b16 %v318
        %v405 = vunpack.c.h.b16 %v318
        %v406 = vunpack.c.l.b16 %v319
        %v407 = vunpack.c.h.b16 %v319
        %v408 = vunpack.c.l.b16 %v320
        %v409 = vunpack.c.h.b16 %v320
        %v410 = vunpack.c.l.b16 %v321
        %v411 = vunpack.c.h.b16 %v321
        %v412 = vunpack.c.l.b16 %v322
        %v413 = vunpack.c.h.b16 %v322
        %v414 = vunpack.c.l.b16 %v323
        %v415 = vunpack.c.h.b16 %v323
        %v416 = vunpack.c.l.b16 %v324
        %v417 = vunpack.c.h.b16 %v324
        %v418 = vunpack.c.l.b16 %v325
        %v419 = vunpack.c.h.b16 %v325
        %v420 = vunpack.c.l.b16 %v326
        %v421 = vunpack.c.h.b16 %v326
        %v422 = vunpack.c.l.b16 %v327
        %v423 = vunpack.c.h.b16 %v327
        %v424 = vunpack.c.l.b16 %v328
        %v425 = vunpack.c.h.b16 %v328
        %v426 = vunpack.c.l.b16 %v329
        %v427 = vunpack.c.h.b16 %v329
        %v428 = vunpack.c.l.b16 %v330
        %v429 = vunpack.c.h.b16 %v330
        %v430 = vunpack.c.l.b16 %v331
        %v431 = vunpack.c.h.b16 %v331
        %v432 = vunpack.c.l.b16 %v332
        %v433 = vunpack.c.h.b16 %v332
        %v434 = vunpack.c.l.b16 %v333
        %v435 = vunpack.c.h.b16 %v333
        %v436 = vunpack.c.l.b16 %v334
        %v437 = vunpack.c.h.b16 %v334
        %v438 = vunpack.c.l.b16 %v335
        %v439 = vunpack.c.h.b16 %v335
        %v440 = vunpack.c.l.b16 %v336
        %v441 = vunpack.c.h.b16 %v336
        %v442 = vunpack.c.l.b16 %v337
        %v443 = vunpack.c.h.b16 %v337
        %v444 = vunpack.c.l.b16 %v338
        %v445 = vunpack.c.h.b16 %v338
        %v446 = vpack.c.b16 %v384, %v382
        %v447 = vpack.c.b16 %v385, %v383
        %v448 = vpack.c.b16 %v388, %v386
        %v449 = vpack.c.b16 %v389, %v387
        %v450 = vpack.c.b16 %v392, %v390
        %v451 = vpack.c.b16 %v393, %v391
        %v452 = vpack.c.b16 %v396, %v394
        %v453 = vpack.c.b16 %v397, %v395
        %v454 = vpack.c.b16 %v400, %v398
        %v455 = vpack.c.b16 %v401, %v399
        %v456 = vpack.c.b16 %v404, %v402
        %v457 = vpack.c.b16 %v405, %v403
        %v458 = vpack.c.b16 %v408, %v406
        %v459 = vpack.c.b16 %v409, %v407
        %v460 = vpack.c.b16 %v412, %v410
        %v461 = vpack.c.b16 %v413, %v411
        %v462 = vpack.c.b16 %v416, %v414
        %v463 = vpack.c.b16 %v417, %v415
        %v464 = vpack.c.b16 %v420, %v418
        %v465 = vpack.c.b16 %v421, %v419
        %v466 = vpack.c.b16 %v424, %v422
        %v467 = vpack.c.b16 %v425, %v423
        %v468 = vpack.c.b16 %v428, %v426
        %v469 = vpack.c.b16 %v429, %v427
        %v470 = vpack.c.b16 %v432, %v430
        %v471 = vpack.c.b16 %v433, %v431
        %v472 = vpack.c.b16 %v436, %v434
        %v473 = vpack.c.b16 %v437, %v435
        %v474 = vpack.c.b16 %v440, %v438
        %v475 = vpack.c.b16 %v441, %v439
        %v476 = vpack.c.b16 %v444, %v442
        %v477 = vpack.c.b16 %v445, %v443
        %510 = vmatprep.subr.bf16.mxu0 %v461
        %511 = vmatpush1.bf16.msra.mxu0 %v460
        %512 = vmatprep.subr.bf16.mxu0 %v459
        %513 = vmatpush1.bf16.msra.mxu0 %v458
        %514 = vmatprep.subr.bf16.mxu0 %v457
        %515 = vmatpush1.bf16.msra.mxu0 %v456
        %516 = vmatprep.subr.bf16.mxu0 %v455
        %517 = vmatpush1.bf16.msra.mxu0 %v454
        %518 = vmatprep.subr.bf16.mxu0 %v453
        %519 = vmatpush1.bf16.msra.mxu0 %v452
        %520 = vmatprep.subr.bf16.mxu0 %v451
        %521 = vmatpush1.bf16.msra.mxu0 %v450
        %522 = vmatprep.subr.bf16.mxu0 %v449
        %523 = vmatpush1.bf16.msra.mxu0 %v448
        %524 = vmatprep.subr.bf16.mxu0 %v447
        %525 = vmatpush1.bf16.msra.mxu0 %v446
        %526 = vmatprep.subr.bf16.mxu0 %v477
        %527 = vmatpush2.bf16.msra.mxu0 %v476
        %528 = vmatprep.subr.bf16.mxu0 %v475
        %529 = vmatpush2.bf16.msra.mxu0 %v474
        %530 = vmatprep.subr.bf16.mxu0 %v473
        %531 = vmatpush2.bf16.msra.mxu0 %v472
        %532 = vmatprep.subr.bf16.mxu0 %v471
        %533 = vmatpush2.bf16.msra.mxu0 %v470
        %534 = vmatprep.subr.bf16.mxu0 %v469
        %535 = vmatpush2.bf16.msra.mxu0 %v468
        %536 = vmatprep.subr.bf16.mxu0 %v467
        %537 = vmatpush2.bf16.msra.mxu0 %v466
        %538 = vmatprep.subr.bf16.mxu0 %v465
        %539 = vmatpush2.bf16.msra.mxu0 %v464
        %540 = vmatprep.subr.bf16.mxu0 %v463
        %541 = vmatpush2.bf16.msra.mxu0 %v462
        %542 = vmatprep.mubr.bf16.mxu0 %v347
        %543 = vmatmul.mubr.bf16.gmra.mxu0 %v346
        %v544 = vpop.f32.mrf.mxu0
        %v545 = vadd.f32 0.0, %v544
        %v546 = vpop.f32.mrf.mxu0
        %v547 = vadd.f32 0.0, %v546
        %v548 = vpop.f32.mrf.mxu0
        %v549 = vpop.f32.mrf.mxu0
        %550 = vdwg.mxu0
        %vm551 = vcmp.ge.f32.partialorder %v545, 0.0
        %vm552 = vcmp.ge.f32.partialorder %v547, 0.0
        %v553 = vmul.f32 %v545, 0.01
        %v554 = vmul.f32 %v547, 0.01
        %v555 = vsel %vm551, %v545, %v553
        %v556 = vsel %vm552, %v547, %v554
        %v559 = vcombine.low %v555, %v556
        %561 = vst [vmem:[%s304] sm:$0xff] %v559
        %s562 = smul.u32 2, %s13
        %p563 = scmp.lt.s32.totalorder %s562, 3
        %s564 = scalar_select %p563, %s562, 3
        %s565 = smul.addr %s564, 4
        %s566 = scalar_lea.vmem %s2, %s565
        // Predicated region
        $region67: #{res_block_forward.12} parent=61 // pred_check
          %p567 = pneg %p78
        $region68: #{res_block_forward.12} parent=61 // pred_check_branch
          %569 = sbr.rel (%p567) target = $region70
        $region69: #{res_block_forward.12} parent=61 // pred_region
          %s570 = smul.u32 2, %s13
        $region70: #{res_block_forward.12} parent=61 // pred_fallthru
          _
      $region62: #{res_block_forward.12} parent=5 // pred_fallthru
        _
      %p571 = scmp.le.s32.totalorder 2, %s8
      // Predicated region
      $region71: #{res_block_forward.12} parent=5 // pred_check
        %p572 = pneg %p571
      $region72: #{res_block_forward.12} parent=5 // pred_check_branch
        %574 = sbr.rel (%p572) target = $region74
      $region73: #{res_block_forward.12} parent=5 // pred_region
        %s575 = ssub.s32 %s8, 2
        // Predicated region
        $region75: #{res_block_forward.12} parent=73 // pred_check
          %p576 = pneg %p84
        $region76: #{res_block_forward.12} parent=73 // pred_check_branch
          %578 = sbr.rel (%p576) target = $region78
        $region77: #{res_block_forward.12} parent=73 // pred_region
          %s579 = smul.u32 2, %s14
          %p580 = scmp.lt.s32.totalorder %s579, 3
          %s581 = scalar_select %p580, %s579, 3
          %s582 = smul.addr %s581, 4
          %s583 = scalar_lea.vmem %s2, %s582
        $region78: #{res_block_forward.12} parent=73 // pred_fallthru
          _
      $region74: #{res_block_forward.12} parent=5 // pred_fallthru
        _
    $region6: #{res_block_forward.12} parent=1 // loop_footer
      %s12 = sadd.s32 1, %s8
    $region7: #{res_block_forward.12} parent=1 // loop_footer_branch
      %7 = sbr.rel target = $region3
    $region8: #{res_block_forward.12} parent=1 // loop_exit
      _

// kernel: res_block_forward.13
$region0: #{res_block_forward.13}
  #allocation0 [shape = 'u32[]', space=smem, size = 0x4, offset = 0x4, fixed_abs, tag = 'smem constant byte address 0x4 - core index']
  #allocation1 [shape = 'u32[144,128]{1,0:T(1,128)}', space=vmem, size = 0x12000, scoped, tag = 'internal scratch']
  %s0 = inlined_call_operand.vmem [shape: bf16[4,8], index: 0, kind: input, shape index: {}]
  %s1 = inlined_call_operand.vmem [shape: bf16[8,512], index: 1, kind: input, shape index: {}]
  %s2 = inlined_call_operand.vmem [shape: f32[4,512], index: 2, kind: input, shape index: {}]
  %s3 = inlined_call_operand.vmem [shape: f32[4,512], index: 3, kind: output, shape index: {}]
  %s4 = sld [smem:[#allocation0]]
  $region45: #{res_block_forward.13} parent=0
    _
  %s6 = ssub.s32 1, %s4
  %s7 = scalar_select 0, %s6, %s4
  loop: start=0, step=1, limit=4
  $region2: #{res_block_forward.13} parent=0 // loop_pre_header
    _
  $region3: #{res_block_forward.13} parent=0 // loop_header
    %s9 = sphi 0, %s13
    %p10 = scmp.ge.s32.totalorder %s9, 4
    %s17 = sphi 0, %s17
    %s19 = sphi 0, %s17
    %s20 = sphi 0, %s19
    %s34 = sphi 0, %s20
    %s40 = sphi 0, %s42
    %s43 = sphi 0, %s40
    %s44 = sphi 0, %s43
    %s60 = sphi 0, %s44
    %s66 = sphi 0, %s68
    %s69 = sphi 0, %s66
    %s70 = sphi 0, %s69
    %s86 = sphi 0, %s70
    %s92 = sphi 0, %s94
    %s95 = sphi 0, %s92
    %s96 = sphi 0, %s95
    %s112 = sphi 0, %s96
  $region4: #{res_block_forward.13} parent=0 // loop_header_branch
    %12 = sbr.rel (%p10) target = $region8
  $region5: #{res_block_forward.13} parent=0 // loop_body
    %s14 = ssub.s32 %s9, 1
    %s15 = ssub.s32 %s9, 2
    %s16 = sadd.s32 %s9, 1
    %s18 = sadd.s32 %s17, 1
    %p21 = scmp.eq.s32.totalorder %s9, 1
    %p22 = scmp.ne.s32.totalorder %s17, %s19
    %p23 = scmp.eq.s32.totalorder %s9, 0
    %p24 = por %p22, %p23
    %p25 = scmp.ne.s32.totalorder %s17, %s19
    %p26 = scmp.eq.s32.totalorder %s14, 1
    %p27 = por %p25, %p26
    %p28 = scmp.ne.s32.totalorder %s19, %s20
    %p29 = scmp.eq.s32.totalorder %s14, 0
    %p30 = por %p28, %p29
    %p31 = scmp.ne.s32.totalorder %s19, %s20
    %p32 = scmp.eq.s32.totalorder %s15, 1
    %p33 = por %p31, %p32
    %p35 = scmp.ne.s32.totalorder %s20, %s34
    %p36 = scmp.eq.s32.totalorder %s15, 0
    %p37 = por %p35, %p36
    %s38 = ssub.s32 %s9, %s16
    %p39 = scmp.eq.s32.totalorder %s38, 0
    %s41 = sadd.s32 %s40, 1
    %s42 = scalar_select %p39, %s40, %s41
    %p45 = pneg %p39
    %p46 = scmp.eq.s32.totalorder %s9, 1
    %p47 = por %p45, %p46
    %p48 = scmp.ne.s32.totalorder %s40, %s43
    %p49 = scmp.eq.s32.totalorder %s9, 0
    %p50 = por %p48, %p49
    %p51 = scmp.ne.s32.totalorder %s40, %s43
    %p52 = scmp.eq.s32.totalorder %s14, 1
    %p53 = por %p51, %p52
    %p54 = scmp.ne.s32.totalorder %s43, %s44
    %p55 = scmp.eq.s32.totalorder %s14, 0
    %p56 = por %p54, %p55
    %p57 = scmp.ne.s32.totalorder %s43, %s44
    %p58 = scmp.eq.s32.totalorder %s15, 1
    %p59 = por %p57, %p58
    %p61 = scmp.ne.s32.totalorder %s44, %s60
    %p62 = scmp.eq.s32.totalorder %s15, 0
    %p63 = por %p61, %p62
    %s64 = ssub.s32 %s9, %s16
    %p65 = scmp.eq.s32.totalorder %s64, 0
    %s67 = sadd.s32 %s66, 1
    %s68 = scalar_select %p65, %s66, %s67
    %p71 = pneg %p65
    %p72 = scmp.eq.s32.totalorder %s9, 1
    %p73 = por %p71, %p72
    %p74 = scmp.ne.s32.totalorder %s66, %s69
    %p75 = scmp.eq.s32.totalorder %s9, 0
    %p76 = por %p74, %p75
    %p77 = scmp.ne.s32.totalorder %s66, %s69
    %p78 = scmp.eq.s32.totalorder %s14, 1
    %p79 = por %p77, %p78
    %p80 = scmp.ne.s32.totalorder %s69, %s70
    %p81 = scmp.eq.s32.totalorder %s14, 0
    %p82 = por %p80, %p81
    %p83 = scmp.ne.s32.totalorder %s69, %s70
    %p84 = scmp.eq.s32.totalorder %s15, 1
    %p85 = por %p83, %p84
    %p87 = scmp.ne.s32.totalorder %s70, %s86
    %p88 = scmp.eq.s32.totalorder %s15, 0
    %p89 = por %p87, %p88
    %s90 = ssub.s32 %s9, %s16
    %p91 = scmp.eq.s32.totalorder %s90, 0
    %s93 = sadd.s32 %s92, 1
    %s94 = scalar_select %p91, %s92, %s93
    %p97 = pneg %p91
    %p98 = scmp.eq.s32.totalorder %s9, 1
    %p99 = por %p97, %p98
    %p100 = scmp.ne.s32.totalorder %s92, %s95
    %p101 = scmp.eq.s32.totalorder %s9, 0
    %p102 = por %p100, %p101
    %p103 = scmp.ne.s32.totalorder %s92, %s95
    %p104 = scmp.eq.s32.totalorder %s14, 1
    %p105 = por %p103, %p104
    %p106 = scmp.ne.s32.totalorder %s95, %s96
    %p107 = scmp.eq.s32.totalorder %s14, 0
    %p108 = por %p106, %p107
    %p109 = scmp.ne.s32.totalorder %s95, %s96
    %p110 = scmp.eq.s32.totalorder %s15, 1
    %p111 = por %p109, %p110
    %p113 = scmp.ne.s32.totalorder %s96, %s112
    %p114 = scmp.eq.s32.totalorder %s15, 0
    %p115 = por %p113, %p114
    %p116 = scmp.le.s32.totalorder 1, %s9
    %p117 = scmp.lt.s32.totalorder %s9, 3
    %p118 = pnand %p116, %p117
    %p119 = pneg %p118
    // Predicated region
    $region9: #{res_block_forward.13} parent=5 // pred_check
      _
    $region10: #{res_block_forward.13} parent=5 // pred_check_branch
      %121 = sbr.rel (%p118) target = $region12
    $region11: #{res_block_forward.13} parent=5 // pred_region
      %s122 = ssub.s32 %s9, 1
      // Predicated region
      $region13: #{res_block_forward.13} parent=11 // pred_check
        %p123 = pneg %p30
      $region14: #{res_block_forward.13} parent=11 // pred_check_branch
        %125 = sbr.rel (%p123) target = $region16
      $region15: #{res_block_forward.13} parent=11 // pred_region
        _
      $region16: #{res_block_forward.13} parent=11 // pred_fallthru
        _
    $region12: #{res_block_forward.13} parent=5 // pred_fallthru
      _
    %p126 = scmp.lt.s32.totalorder %s9, 2
    // Predicated region
    $region17: #{res_block_forward.13} parent=5 // pred_check
      %p127 = pneg %p126
    $region18: #{res_block_forward.13} parent=5 // pred_check_branch
      %129 = sbr.rel (%p127) target = $region20
    $region19: #{res_block_forward.13} parent=5 // pred_region
      // Predicated region
      $region21: #{res_block_forward.13} parent=19 // pred_check
        %p130 = pneg %p50
      $region22: #{res_block_forward.13} parent=19 // pred_check_branch
        %132 = sbr.rel (%p130) target = $region24
      $region23: #{res_block_forward.13} parent=19 // pred_region
        %s133 = smul.u32 2, %s9
        %p134 = scmp.lt.s32.totalorder %s133, 3
        %s135 = scalar_select %p134, %s133, 3
        %s136 = smul.addr %s135, 4
        %s137 = scalar_lea.vmem %s1, %s136
        %s138 = smul.u32 2, %s9
      $region24: #{res_block_forward.13} parent=19 // pred_fallthru
        _
      // Predicated region
      $region25: #{res_block_forward.13} parent=19 // pred_check
        %p139 = pneg %p76
      $region26: #{res_block_forward.13} parent=19 // pred_check_branch
        %141 = sbr.rel (%p139) target = $region28
      $region27: #{res_block_forward.13} parent=19 // pred_region
        %s142 = smul.u32 2, %s9
        %p143 = scmp.lt.s32.totalorder %s142, 3
        %s144 = scalar_select %p143, %s142, 3
        %s145 = smul.addr %s144, 4
        %s146 = scalar_lea.vmem %s2, %s145
        %s147 = smul.u32 2, %s9
      $region28: #{res_block_forward.13} parent=19 // pred_fallthru
        _
    $region20: #{res_block_forward.13} parent=5 // pred_fallthru
      _
    %p148 = scmp.le.s32.totalorder 1, %s9
    %p149 = scmp.lt.s32.totalorder %s9, 3
    %p150 = pnand %p148, %p149
    %p151 = pneg %p150
    // Predicated region
    $region29: #{res_block_forward.13} parent=5 // pred_check
      _
    $region30: #{res_block_forward.13} parent=5 // pred_check_branch
      %153 = sbr.rel (%p150) target = $region32
    $region31: #{res_block_forward.13} parent=5 // pred_region
      %s154 = ssub.s32 %s9, 1
      %p155 = pneg %p30
      %p156 = pneg %p27
      %s157 = smul.u32 2, %s14
      %p158 = scmp.lt.s32.totalorder %s157, 3
      %s159 = scalar_select %p158, %s157, 3
      %s160 = smul.addr %s159, 4
      %s161 = scalar_lea.vmem %s1, %s160
      %p162 = pneg %p56
      %p163 = pneg %p53
      %s164 = smul.u32 2, %s14
      %p165 = scmp.lt.s32.totalorder %s164, 3
      %s166 = scalar_select %p165, %s164, 3
      %s167 = smul.addr %s166, 4
      %s168 = scalar_lea.vmem %s2, %s167
      %p169 = pneg %p82
      %p170 = pneg %p79
      %p171 = pneg %p108
      %p172 = pneg %p105
      %s173 = smul.u32 2, %s14
      %p174 = scmp.lt.s32.totalorder %s173, 3
      %s175 = scalar_select %p174, %s173, 3
      %s176 = smul.addr %s175, 4
      %s177 = scalar_lea.vmem %s3, %s176
      %s178 = smul.u32 2, %s14
      %p179 = scmp.lt.s32.totalorder %s178, 3
      %s180 = scalar_select %p179, %s178, 3
      %s181 = smul.addr %s180, 4
      %s182 = scalar_lea.vmem %s1, %s181
      %s183 = smul.u32 2, %s14
      %s184 = smul.u32 2, %s14
      %p185 = scmp.lt.s32.totalorder %s184, 3
      %s186 = scalar_select %p185, %s184, 3
      %s187 = smul.addr %s186, 4
      %s188 = scalar_lea.vmem %s2, %s187
      %s189 = smul.u32 2, %s14
      %s190 = smul.u32 2, %s14
      %p191 = scmp.lt.s32.totalorder %s190, 3
      %s192 = scalar_select %p191, %s190, 3
      %s193 = smul.addr %s192, 4
      %s194 = scalar_lea.vmem %s3, %s193
      %s195 = smul.u32 2, %s14
      %v197 = vld [vmem:[%s0] sm:$0x3]
      %v198 = vld [vmem:[%s182] sm:$0xff]
      %v200 = vunpack.c.l.b16 %v198
      %v201 = vunpack.c.h.b16 %v198
      %v202 = vpack.c.b16 %v200, %v200
      %v203 = vpack.c.b16 %v201, %v201
      %vm204 = vcmask 64512
      %v206 = vsel %vm204, %v197, 0
      %vm208 = vcmask 1043456
      %v210 = vsel %vm208, %v202, 0
      %v213 = vsel %vm208, %v203, 0
      %215 = vmatprep.subr.bf16.mxu0 0
      %216 = vmatpush1.bf16.msra.mxu0 0
      %217 = vmatprep.subr.bf16.mxu0 0
      %218 = vmatpush1.bf16.msra.mxu0 0
      %219 = vmatprep.subr.bf16.mxu0 0
      %220 = vmatpush1.bf16.msra.mxu0 0
      %221 = vmatprep.subr.bf16.mxu0 0
      %222 = vmatpush1.bf16.msra.mxu0 0
      %223 = vmatprep.subr.bf16.mxu0 0
      %224 = vmatpush1.bf16.msra.mxu0 0
      %225 = vmatprep.subr.bf16.mxu0 0
      %226 = vmatpush1.bf16.msra.mxu0 0
      %227 = vmatprep.subr.bf16.mxu0 0
      %228 = vmatpush1.bf16.msra.mxu0 0
      %229 = vmatprep.subr.bf16.mxu0 %v213
      %230 = vmatpush1.bf16.msra.mxu0 %v210
      %231 = vmatprep.subr.bf16.mxu0 0
      %232 = vmatpush2.bf16.msra.mxu0 0
      %233 = vmatprep.subr.bf16.mxu0 0
      %234 = vmatpush2.bf16.msra.mxu0 0
      %235 = vmatprep.subr.bf16.mxu0 0
      %236 = vmatpush2.bf16.msra.mxu0 0
      %237 = vmatprep.subr.bf16.mxu0 0
      %238 = vmatpush2.bf16.msra.mxu0 0
      %239 = vmatprep.subr.bf16.mxu0 0
      %240 = vmatpush2.bf16.msra.mxu0 0
      %241 = vmatprep.subr.bf16.mxu0 0
      %242 = vmatpush2.bf16.msra.mxu0 0
      %243 = vmatprep.subr.bf16.mxu0 0
      %244 = vmatpush2.bf16.msra.mxu0 0
      %245 = vmatprep.subr.bf16.mxu0 0
      %246 = vmatpush2.bf16.msra.mxu0 0
      %247 = vmatprep.mubr.bf16.mxu0 0
      %248 = vmatmul.mubr.bf16.gmra.mxu0 %v206
      %v249 = vpop.f32.mrf.mxu0
      %v250 = vadd.f32 0.0, %v249
      %v251 = vpop.f32.mrf.mxu0
      %v252 = vadd.f32 0.0, %v251
      %v253 = vpop.f32.mrf.mxu0
      %v254 = vpop.f32.mrf.mxu0
      %255 = vdwg.mxu0
      %vm256 = vcmp.ge.f32.partialorder %v250, 0.0
      %vm257 = vcmp.ge.f32.partialorder %v252, 0.0
      %v258 = vmul.f32 %v250, 0.01
      %v259 = vmul.f32 %v252, 0.01
      %v260 = vsel %vm256, %v250, %v258
      %v261 = vsel %vm257, %v252, %v259
      %v262 = vld [vmem:[%s188] sm:$0xff]
      %v264 = vcombine.high %v262, %v262
      %v266 = vadd.f32 %v260, %v262
      %v267 = vadd.f32 %v261, %v264
      %v270 = vcombine.low %v266, %v267
      %272 = vst [vmem:[%s194] sm:$0xff] %v270
      %s273 = smul.u32 2, %s14
      %p274 = scmp.lt.s32.totalorder %s273, 3
      %s275 = scalar_select %p274, %s273, 3
      %s276 = smul.addr %s275, 4
      %s277 = scalar_lea.vmem %s3, %s276
      // Predicated region
      $region33: #{res_block_forward.13} parent=31 // pred_check
        %p278 = pneg %p105
      $region34: #{res_block_forward.13} parent=31 // pred_check_branch
        %280 = sbr.rel (%p278) target = $region36
      $region35: #{res_block_forward.13} parent=31 // pred_region
        %s281 = smul.u32 2, %s14
      $region36: #{res_block_forward.13} parent=31 // pred_fallthru
        _
    $region32: #{res_block_forward.13} parent=5 // pred_fallthru
      _
    %p282 = scmp.le.s32.totalorder 2, %s9
    // Predicated region
    $region37: #{res_block_forward.13} parent=5 // pred_check
      %p283 = pneg %p282
    $region38: #{res_block_forward.13} parent=5 // pred_check_branch
      %285 = sbr.rel (%p283) target = $region40
    $region39: #{res_block_forward.13} parent=5 // pred_region
      %s286 = ssub.s32 %s9, 2
      // Predicated region
      $region41: #{res_block_forward.13} parent=39 // pred_check
        %p287 = pneg %p111
      $region42: #{res_block_forward.13} parent=39 // pred_check_branch
        %289 = sbr.rel (%p287) target = $region44
      $region43: #{res_block_forward.13} parent=39 // pred_region
        %s290 = smul.u32 2, %s15
        %p291 = scmp.lt.s32.totalorder %s290, 3
        %s292 = scalar_select %p291, %s290, 3
        %s293 = smul.addr %s292, 4
        %s294 = scalar_lea.vmem %s3, %s293
      $region44: #{res_block_forward.13} parent=39 // pred_fallthru
        _
    $region40: #{res_block_forward.13} parent=5 // pred_fallthru
      _
  $region6: #{res_block_forward.13} parent=0 // loop_footer
    %s13 = sadd.s32 1, %s9
  $region7: #{res_block_forward.13} parent=0 // loop_footer_branch
    %8 = sbr.rel target = $region3
  $region8: #{res_block_forward.13} parent=0 // loop_exit
    _

</llo_original>
